<compile_context>
chip_gen: v7x
topology: tpu7x:2x2x1
jax: 0.10.0
libtpu: 0.0.40
codegen_flags: <defaults>
</compile_context>

<pallas_src>
import functools

import jax
import jax.numpy as jnp
from jax import lax
from jax.experimental import pallas as pl
from jax.experimental.pallas import tpu as pltpu

_NEG_INF = -1e30


def _round_up(x, m):
    return (x + m - 1) // m * m


def _vmem_budget_bytes():
    # Generation-aware budget with ~25% headroom for Mosaic internal scratch:
    # v7x (64 MiB/core) -> ~48 MiB; v5e/v6e (128 MiB) -> ~96 MiB.
    cap = 64 * 1024 * 1024
    try:
        cap = int(pltpu.get_tpu_info().vmem_capacity_bytes)
    except Exception:
        pass
    return int(cap) * 3 // 4


def _pick_col_tile(c_resp, DP, BP, vmem_budget):
    """Largest lane-dense column tile whose working set fits the VMEM budget."""
    cp128 = _round_up(c_resp, 128)
    best = 128
    for t in (2048, 1024, 512, 256, 128):
        if t > cp128:
            continue          # don't over-pad tiny candidate sets
        est = (2 * t * DP * 2        # hr tile, double-buffered, bf16
               + t * DP * 4          # f32 pooler intermediate (pre-tanh)
               + t * DP * 2          # bf16 pooled response tile
               + 2 * BP * t * 4      # score tile, double-buffered, f32
               + DP * DP * 2         # W^T (single-buffered)
               + 2 * BP * DP * 2     # hc block + ctx_rep scratch (bf16)
               + BP * t * 4)         # score compute temp
        if est <= int(vmem_budget * 0.85):
            best = t
            break
    return best


# ----------------------------- fused Pallas kernel -------------------------- #

def _fused_kernel(hc_ref, hr_ref, w_ref, b_ref,               # inputs
                  scores_ref, m_ref, l_ref, t_ref,            # outputs
                  ctx_rep,                                     # VMEM scratch
                  *, bsz, c_resp, col_tile, tiles_per_split, has_col_pad):
    sp = pl.program_id(0)          # column-split index (parallel; 2 TCs on v7x)
    j = pl.program_id(1)           # column-tile index within the split (arbitrary)
    col0 = (sp * tiles_per_split + j) * col_tile

    @pl.when(j == 0)
    def _init():
        # Pooler for the context rows (hc / W / bias stay resident; done once
        # per split).  tanh(hc @ W^T + b) with W^T pre-transposed in the wrapper.
        yc = jnp.dot(hc_ref[...], w_ref[...], preferred_element_type=jnp.float32)
        ctx_rep[...] = jnp.tanh(yc + b_ref[...]).astype(ctx_rep.dtype)
        # Online-LSE state lives in the (revisited) output blocks.
        m_ref[...] = jnp.full(m_ref.shape, _NEG_INF, dtype=jnp.float32)
        l_ref[...] = jnp.zeros(l_ref.shape, jnp.float32)
        t_ref[...] = jnp.zeros(t_ref.shape, jnp.float32)

    # Pooler for this response/candidate row tile: tanh(h @ W^T + b).
    yr = jnp.dot(hr_ref[...], w_ref[...], preferred_element_type=jnp.float32)
    r_rep = jnp.tanh(yr + b_ref[...]).astype(jnp.bfloat16)

    # scores tile = einsum('bd,cd->bc') -> contract dim 1 of both operands
    # (native MXU trans_b form, same pattern as flash-attention q@k^T).
    s = lax.dot_general(ctx_rep[...], r_rep,
                        dimension_numbers=(((1,), (1,)), ((), ())),
                        preferred_element_type=jnp.float32)        # [BP, TM]
    scores_ref[...] = s    # raw scores; padded cols/rows are sliced off in glue

    if has_col_pad:  # static: mask padded response columns before the LSE
        col_g = lax.broadcasted_iota(jnp.int32, s.shape, 1) + col0
        s = jnp.where(col_g < c_resp, s, _NEG_INF)

    # CrossEntropy(all_scores, arange(batch)): target logit is the diagonal.
    # Only tiles that intersect the diagonal do this work.
    @pl.when(col0 < bsz)
    def _tgt():
        col_g = lax.broadcasted_iota(jnp.int32, s.shape, 1) + col0
        row = lax.broadcasted_iota(jnp.int32, s.shape, 0)
        t_ref[0] += jnp.sum(jnp.where(col_g == row, s, 0.0), axis=1, keepdims=True)

    # Online logsumexp accumulation across this split's column tiles.
    m_prev = m_ref[0]
    m_new = jnp.maximum(m_prev, jnp.max(s, axis=1, keepdims=True))
    l_ref[0] = (l_ref[0] * jnp.exp(m_prev - m_new)
                + jnp.sum(jnp.exp(s - m_new), axis=1, keepdims=True))
    m_ref[0] = m_new


def fused_ret_head(h_ctx, h_resp, w, bias):
    """Fused pooler + score + CE-loss head.

    h_ctx : [b, d]            selected eos hidden states (context)
    h_resp: [b + b*cand, d]   selected eos hidden states (response rows first,
                              then flattened candidate rows)
    w     : [d, d]            nn.Linear weight ([out, in])
    bias  : [d]               nn.Linear bias
    Returns (all_scores [b, b + b*cand] f32, ret_loss scalar f32).
    """
    bsz, d = h_ctx.shape
    c_resp = h_resp.shape[0]

    DP = _round_up(d, 128)          # lane-dense model dim
    BP = _round_up(bsz, 16)         # bf16-packed batch rows
    budget = _vmem_budget_bytes()
    TM = _pick_col_tile(c_resp, DP, BP, budget)
    CP = _round_up(c_resp, TM)      # lane-dense score columns
    n_tiles = CP // TM
    n_splits = 2 if (n_tiles >= 2 and n_tiles % 2 == 0) else 1   # 2 TCs on v7x
    tiles_per_split = n_tiles // n_splits

    # Single fused cast+pad per operand (no extra f32 staging copy).
    # TODO(synk): an in-kernel DMA gather of eos rows (scalar-prefetched row
    # indices) would remove this padded HBM copy entirely.
    hc = jnp.pad(h_ctx.astype(jnp.bfloat16), ((0, BP - bsz), (0, DP - d)))
    hr = jnp.pad(h_resp.astype(jnp.bfloat16), ((0, CP - c_resp), (0, DP - d)))
    wt = jnp.pad(w.T.astype(jnp.bfloat16), ((0, DP - d), (0, DP - d)))
    brow = jnp.pad(bias.astype(jnp.float32), (0, DP - d))[None, :]

    kernel = functools.partial(_fused_kernel, bsz=bsz, c_resp=c_resp,
                               col_tile=TM, tiles_per_split=tiles_per_split,
                               has_col_pad=(CP != c_resp))

    def build_call(single_buffer_constants):
        pm = pl.Buffered(1) if single_buffer_constants else None
        in_specs = [
            pl.BlockSpec((BP, DP), lambda sp, j: (0, 0), pipeline_mode=pm),  # hc
            pl.BlockSpec((TM, DP),
                         lambda sp, j: (sp * tiles_per_split + j, 0)),       # hr tiled
            pl.BlockSpec((DP, DP), lambda sp, j: (0, 0), pipeline_mode=pm),  # W^T
            pl.BlockSpec((1, DP), lambda sp, j: (0, 0), pipeline_mode=pm),   # bias
        ]
        out_specs = (
            pl.BlockSpec((BP, TM),
                         lambda sp, j: (0, sp * tiles_per_split + j)),       # scores
            pl.BlockSpec((1, BP, 1), lambda sp, j: (sp, 0, 0)),              # m
            pl.BlockSpec((1, BP, 1), lambda sp, j: (sp, 0, 0)),              # l
            pl.BlockSpec((1, BP, 1), lambda sp, j: (sp, 0, 0)),              # tgt
        )
        return pl.pallas_call(
            kernel,
            out_shape=(jax.ShapeDtypeStruct((BP, CP), jnp.float32),
                       jax.ShapeDtypeStruct((n_splits, BP, 1), jnp.float32),
                       jax.ShapeDtypeStruct((n_splits, BP, 1), jnp.float32),
                       jax.ShapeDtypeStruct((n_splits, BP, 1), jnp.float32)),
            grid=(n_splits, tiles_per_split),
            in_specs=in_specs,
            out_specs=out_specs,
            scratch_shapes=[pltpu.VMEM((BP, DP), jnp.bfloat16)],  # pooled context
            compiler_params=pltpu.CompilerParams(
                dimension_semantics=("parallel", "arbitrary"),
                vmem_limit_bytes=budget),
        )

    try:
        scores_p, m_p, l_p, t_p = build_call(True)(hc, hr, wt, brow)
    except Exception:
        # Installed JAX rejected single-buffered pipeline_mode; use defaults.
        scores_p, m_p, l_p, t_p = build_call(False)(hc, hr, wt, brow)

    # Cheap finalize in glue: merge per-split LSE partials, CE mean.
    m = m_p[:, :bsz, 0]                                   # [n_splits, bsz]
    l = l_p[:, :bsz, 0]
    t = jnp.sum(t_p[:, :bsz, 0], axis=0)                  # [bsz]
    m_g = jnp.max(m, axis=0)                              # [bsz]
    lse = m_g + jnp.log(jnp.sum(l * jnp.exp(m - m_g[None, :]), axis=0))
    ret_loss = jnp.mean(lse - t)

    return scores_p[:bsz, :c_resp], ret_loss


# --------------------------------- JAX glue --------------------------------- #

def synthetic_encoder(input_ids, attn_mask, emb, pos_emb):
    # TODO(synk): `bart_conditional.model` is an external pretrained BART model
    # injected in __init__; stubbed with a deterministic embedding + positional
    # encoder producing `encoder_last_hidden_state` [n, s, d].
    h = emb[input_ids] + pos_emb[None, : input_ids.shape[1], :]
    return h * attn_mask[..., None].astype(h.dtype)


def select_eos(hidden, eos_pos):
    # hidden[eos_pos == 1, :] with exactly one '1' per row -> [n, d]
    idx = jnp.argmax(eos_pos, axis=-1)
    return hidden[jnp.arange(hidden.shape[0]), idx]


def ret_only_forward(batch_data, params):
    emb, pos_emb, w, b = params

    ctx_h = synthetic_encoder(batch_data['context_input_ids'],
                              batch_data['context_attention_mask'], emb, pos_emb)
    h_ctx = select_eos(ctx_h, batch_data['context_eos_position'])

    resp_h = synthetic_encoder(batch_data['response_input_ids'],
                               batch_data['response_attention_mask'], emb, pos_emb)
    h_resp = select_eos(resp_h, batch_data['response_eos_position'])

    cand_ids = batch_data['cand_response_input_ids']
    r1, r2, r3 = cand_ids.shape
    cand_h = synthetic_encoder(
        cand_ids.reshape(r1 * r2, r3),
        batch_data['cand_response_attention_mask'].reshape(r1 * r2, r3),
        emb, pos_emb)
    h_cand = select_eos(cand_h,
                        batch_data['cand_response_eos_position'].reshape(r1 * r2, r3))

    # cat([ctx@resp^T, ctx@cand^T], dim=1) == ctx @ cat([resp, cand], 0)^T
    h_all_resp = jnp.concatenate([h_resp, h_cand], axis=0)
    return fused_ret_head(h_ctx, h_all_resp, w, b)


def _reference_forward(batch_data, params):
    # Pure-JAX f32 reference (numerics check; kernel uses bf16 MXU inputs).
    emb, pos_emb, w, b = params

    def rep(ids, mask, eos):
        h = synthetic_encoder(ids, mask, emb, pos_emb)
        return jnp.tanh(select_eos(h, eos) @ w.T + b)

    ctx = rep(batch_data['context_input_ids'],
              batch_data['context_attention_mask'],
              batch_data['context_eos_position'])
    resp = rep(batch_data['response_input_ids'],
               batch_data['response_attention_mask'],
               batch_data['response_eos_position'])
    r1, r2, r3 = batch_data['cand_response_input_ids'].shape
    cand = rep(batch_data['cand_response_input_ids'].reshape(r1 * r2, r3),
               batch_data['cand_response_attention_mask'].reshape(r1 * r2, r3),
               batch_data['cand_response_eos_position'].reshape(r1 * r2, r3))
    all_resp = jnp.concatenate([resp, cand], axis=0)
    s = ctx @ all_resp.T
    lse = jax.scipy.special.logsumexp(s, axis=1)
    tgt = s[jnp.arange(ctx.shape[0]), jnp.arange(ctx.shape[0])]
    return s, jnp.mean(lse - tgt)


# ----------------------------------- main ------------------------------------ #

if __name__ == "__main__":
    batch, seq_len, cand_num, d_model, vocab = 2, 8, 3, 32, 64
    key = jax.random.PRNGKey(0)
    k1, k2, k3, k4, k5, k6, k7 = jax.random.split(key, 7)

    # Deterministic parameters (module __init__: dense = Linear(d_model, d_model))
    w = jax.random.normal(k1, (d_model, d_model), jnp.float32) * 0.05  # [out, in]
    b = jax.random.normal(k2, (d_model,), jnp.float32) * 0.05
    emb = jax.random.normal(k3, (vocab, d_model), jnp.float32) * 0.1
    pos_emb = jax.random.normal(k4, (seq_len, d_model), jnp.float32) * 0.1
    params = (emb, pos_emb, w, b)

    context_ids = jax.random.randint(k5, (batch, seq_len), 0, vocab)
    response_ids = jax.random.randint(k6, (batch, seq_len), 0, vocab)
    cand_ids = jax.random.randint(k7, (batch, cand_num, seq_len), 0, vocab)

    eos2d = jnp.zeros((batch, seq_len), jnp.int32).at[:, -1].set(1)
    eos3d = jnp.zeros((batch, cand_num, seq_len), jnp.int32).at[:, :, -1].set(1)

    batch_data = {
        'context_input_ids': context_ids,
        'context_attention_mask': jnp.ones((batch, seq_len), jnp.int32),
        'context_eos_position': eos2d,
        'response_input_ids': response_ids,
        'response_attention_mask': jnp.ones((batch, seq_len), jnp.int32),
        'response_eos_position': eos2d,
        'cand_response_input_ids': cand_ids,
        'cand_response_attention_mask': jnp.ones((batch, cand_num, seq_len), jnp.int32),
        'cand_response_eos_position': eos3d,
    }

    all_scores, ret_loss = ret_only_forward(batch_data, params)
    jax.block_until_ready(ret_loss)
    jax.block_until_ready(all_scores)

    assert all_scores.shape == (batch, batch + batch * cand_num)
    assert ret_loss.shape == ()

    ref_scores, ref_loss = _reference_forward(batch_data, params)
    assert jnp.allclose(all_scores, ref_scores, atol=5e-2, rtol=5e-2)
    assert jnp.allclose(ret_loss, ref_loss, atol=5e-2, rtol=5e-2)

    print("KERNEL_OK")
</pallas_src>

<mosaic_0001>
module attributes {stable_mosaic.version = 11 : i64} {
  func.func @_fused_kernel(%arg0: i32, %arg1: i32, %arg2: memref<16x128xbf16, #tpu.memory_space<vmem>>, %arg3: memref<128x128xbf16, #tpu.memory_space<vmem>>, %arg4: memref<128x128xbf16, #tpu.memory_space<vmem>>, %arg5: memref<1x128xf32, #tpu.memory_space<vmem>>, %arg6: memref<16x128xf32, #tpu.memory_space<vmem>>, %arg7: memref<1x16x1xf32, #tpu.memory_space<vmem>>, %arg8: memref<1x16x1xf32, #tpu.memory_space<vmem>>, %arg9: memref<1x16x1xf32, #tpu.memory_space<vmem>>, %arg10: memref<16x128xbf16, #tpu.memory_space<vmem>>) attributes {dimension_semantics = [#tpu.dimension_semantics<parallel>, #tpu.dimension_semantics<arbitrary>], iteration_bounds = array<i64: 1, 1>, scalar_prefetch = 0 : i64, scratch_operands = 1 : i64, tpu.core_type = #tpu.core_type<tc>, window_params = [{pipeline_mode = #tpu.pipeline_mode<synchronous>, transform_indices = @transform_0, window_bounds = array<i64: 16, 128>}, {transform_indices = @transform_1, window_bounds = array<i64: 128, 128>}, {pipeline_mode = #tpu.pipeline_mode<synchronous>, transform_indices = @transform_2, window_bounds = array<i64: 128, 128>}, {pipeline_mode = #tpu.pipeline_mode<synchronous>, transform_indices = @transform_3, window_bounds = array<i64: 1, 128>}, {transform_indices = @transform_4, window_bounds = array<i64: 16, 128>}, {transform_indices = @transform_5, window_bounds = array<i64: 1, 16, 1>}, {transform_indices = @transform_6, window_bounds = array<i64: 1, 16, 1>}, {transform_indices = @transform_7, window_bounds = array<i64: 1, 16, 1>}]} {
    %c1_i32 = arith.constant 1 : i32
    %0 = arith.muli %arg0, %c1_i32 : i32
    %1 = arith.addi %0, %arg1 : i32
    %c128_i32 = arith.constant 128 : i32
    %2 = arith.muli %1, %c128_i32 : i32
    %c0_i32 = arith.constant 0 : i32
    %3 = arith.cmpi eq, %arg1, %c0_i32 : i32
    %4 = arith.extui %3 : i1 to i32
    %c0_i32_0 = arith.constant 0 : i32
    %5 = arith.cmpi ne, %4, %c0_i32_0 : i32
    scf.if %5 {
      %c0_27 = arith.constant 0 : index
      %c0_28 = arith.constant 0 : index
      %49 = vector.load %arg2[%c0_27, %c0_28] : memref<16x128xbf16, #tpu.memory_space<vmem>>, vector<16x128xbf16>
      %c0_29 = arith.constant 0 : index
      %c0_30 = arith.constant 0 : index
      %50 = vector.load %arg4[%c0_29, %c0_30] : memref<128x128xbf16, #tpu.memory_space<vmem>>, vector<128x128xbf16>
      %cst_31 = arith.constant dense<0.000000e+00> : vector<16x128xf32>
      %51 = tpu.matmul %49, %50, %cst_31 {dimension_numbers = #tpu.dot_dimension_numbers<[1], [0], [0], [1], [0, 0, 1, 1], [], []>} : vector<16x128xbf16>, vector<128x128xbf16>, vector<16x128xf32> -> vector<16x128xf32>
      %c0_32 = arith.constant 0 : index
      %c0_33 = arith.constant 0 : index
      %52 = vector.load %arg5[%c0_32, %c0_33] : memref<1x128xf32, #tpu.memory_space<vmem>>, vector<1x128xf32>
      %53 = vector.broadcast %52 : vector<1x128xf32> to vector<16x128xf32>
      %54 = arith.addf %51, %53 : vector<16x128xf32>
      %55 = math.tanh %54 : vector<16x128xf32>
      %56 = arith.truncf %55 : vector<16x128xf32> to vector<16x128xbf16>
      %c0_34 = arith.constant 0 : index
      %c0_35 = arith.constant 0 : index
      %57 = vector.load %arg10[%c0_34, %c0_35] : memref<16x128xbf16, #tpu.memory_space<vmem>>, vector<16x128xbf16>
      tpu.vector_store %arg10[%c0_34, %c0_35], %56 {strides = array<i32>} : memref<16x128xbf16, #tpu.memory_space<vmem>>, vector<16x128xbf16>,
      %cst_36 = arith.constant -1.000000e+30 : f32
      %58 = vector.broadcast %cst_36 : f32 to vector<1x16x1xf32>
      %c0_37 = arith.constant 0 : index
      %c0_38 = arith.constant 0 : index
      %c0_39 = arith.constant 0 : index
      %59 = vector.load %arg7[%c0_37, %c0_38, %c0_39] : memref<1x16x1xf32, #tpu.memory_space<vmem>>, vector<1x16x1xf32>
      tpu.vector_store %arg7[%c0_37, %c0_38, %c0_39], %58 {strides = array<i32>} : memref<1x16x1xf32, #tpu.memory_space<vmem>>, vector<1x16x1xf32>,
      %cst_40 = arith.constant 0.000000e+00 : f32
      %60 = vector.broadcast %cst_40 : f32 to vector<1x16x1xf32>
      %c0_41 = arith.constant 0 : index
      %c0_42 = arith.constant 0 : index
      %c0_43 = arith.constant 0 : index
      %61 = vector.load %arg8[%c0_41, %c0_42, %c0_43] : memref<1x16x1xf32, #tpu.memory_space<vmem>>, vector<1x16x1xf32>
      tpu.vector_store %arg8[%c0_41, %c0_42, %c0_43], %60 {strides = array<i32>} : memref<1x16x1xf32, #tpu.memory_space<vmem>>, vector<1x16x1xf32>,
      %cst_44 = arith.constant 0.000000e+00 : f32
      %62 = vector.broadcast %cst_44 : f32 to vector<1x16x1xf32>
      %c0_45 = arith.constant 0 : index
      %c0_46 = arith.constant 0 : index
      %c0_47 = arith.constant 0 : index
      %63 = vector.load %arg9[%c0_45, %c0_46, %c0_47] : memref<1x16x1xf32, #tpu.memory_space<vmem>>, vector<1x16x1xf32>
      tpu.vector_store %arg9[%c0_45, %c0_46, %c0_47], %62 {strides = array<i32>} : memref<1x16x1xf32, #tpu.memory_space<vmem>>, vector<1x16x1xf32>,
    } else {
    }
    %c0 = arith.constant 0 : index
    %c0_1 = arith.constant 0 : index
    %6 = vector.load %arg3[%c0, %c0_1] : memref<128x128xbf16, #tpu.memory_space<vmem>>, vector<128x128xbf16>
    %c0_2 = arith.constant 0 : index
    %c0_3 = arith.constant 0 : index
    %7 = vector.load %arg4[%c0_2, %c0_3] : memref<128x128xbf16, #tpu.memory_space<vmem>>, vector<128x128xbf16>
    %cst = arith.constant dense<0.000000e+00> : vector<128x128xf32>
    %8 = tpu.matmul %6, %7, %cst {dimension_numbers = #tpu.dot_dimension_numbers<[1], [0], [0], [1], [0, 0, 1, 1], [], []>} : vector<128x128xbf16>, vector<128x128xbf16>, vector<128x128xf32> -> vector<128x128xf32>
    %c0_4 = arith.constant 0 : index
    %c0_5 = arith.constant 0 : index
    %9 = vector.load %arg5[%c0_4, %c0_5] : memref<1x128xf32, #tpu.memory_space<vmem>>, vector<1x128xf32>
    %10 = vector.broadcast %9 : vector<1x128xf32> to vector<128x128xf32>
    %11 = arith.addf %8, %10 : vector<128x128xf32>
    %12 = math.tanh %11 : vector<128x128xf32>
    %13 = arith.truncf %12 : vector<128x128xf32> to vector<128x128xbf16>
    %c0_6 = arith.constant 0 : index
    %c0_7 = arith.constant 0 : index
    %14 = vector.load %arg10[%c0_6, %c0_7] : memref<16x128xbf16, #tpu.memory_space<vmem>>, vector<16x128xbf16>
    %cst_8 = arith.constant dense<0.000000e+00> : vector<16x128xf32>
    %15 = tpu.matmul %14, %13, %cst_8 {dimension_numbers = #tpu.dot_dimension_numbers<[1], [1], [0], [0], [0, 0, 1, 0], [], []>} : vector<16x128xbf16>, vector<128x128xbf16>, vector<16x128xf32> -> vector<16x128xf32>
    %c0_9 = arith.constant 0 : index
    %c0_10 = arith.constant 0 : index
    %16 = vector.load %arg6[%c0_9, %c0_10] : memref<16x128xf32, #tpu.memory_space<vmem>>, vector<16x128xf32>
    tpu.vector_store %arg6[%c0_9, %c0_10], %15 {strides = array<i32>} : memref<16x128xf32, #tpu.memory_space<vmem>>, vector<16x128xf32>,
    %17 = tpu.iota {dimensions = array<i32: 1>} : vector<16x128xi32>
    %18 = vector.broadcast %2 : i32 to vector<16x128xi32>
    %19 = arith.addi %17, %18 : vector<16x128xi32>
    %c8_i32 = arith.constant 8 : i32
    %20 = vector.broadcast %c8_i32 : i32 to vector<16x128xi32>
    %21 = arith.cmpi slt, %19, %20 : vector<16x128xi32>
    %cst_11 = arith.constant -1.000000e+30 : f32
    %22 = vector.broadcast %cst_11 : f32 to vector<16x128xf32>
    %23 = arith.select %21, %15, %22 : vector<16x128xi1>, vector<16x128xf32>
    %c2_i32 = arith.constant 2 : i32
    %24 = arith.cmpi slt, %2, %c2_i32 : i32
    %25 = arith.extui %24 : i1 to i32
    %c0_i32_12 = arith.constant 0 : i32
    %26 = arith.cmpi ne, %25, %c0_i32_12 : i32
    scf.if %26 {
      %49 = tpu.iota {dimensions = array<i32: 1>} : vector<16x128xi32>
      %50 = vector.broadcast %2 : i32 to vector<16x128xi32>
      %51 = arith.addi %49, %50 : vector<16x128xi32>
      %52 = tpu.iota {dimensions = array<i32: 0>} : vector<16x128xi32>
      %c0_27 = arith.constant 0 : index
      %c0_28 = arith.constant 0 : index
      %c0_29 = arith.constant 0 : index
      %53 = vector.load %arg9[%c0_27, %c0_28, %c0_29] : memref<1x16x1xf32, #tpu.memory_space<vmem>>, vector<1x16x1xf32>
      %54 = vector.shape_cast %53 : vector<1x16x1xf32> to vector<16x1xf32>
      %55 = arith.cmpi eq, %51, %52 : vector<16x128xi32>
      %cst_30 = arith.constant 0.000000e+00 : f32
      %56 = vector.broadcast %cst_30 : f32 to vector<16x128xf32>
      %57 = arith.select %55, %23, %56 : vector<16x128xi1>, vector<16x128xf32>
      %cst_31 = arith.constant dense<0.000000e+00> : vector<16xf32>
      %58 = vector.multi_reduction <add>, %57, %cst_31 [1] : vector<16x128xf32> to vector<16xf32>
      %59 = vector.shape_cast %58 : vector<16xf32> to vector<16x1xf32>
      %60 = arith.addf %54, %59 : vector<16x1xf32>
      %c0_32 = arith.constant 0 : index
      %c0_33 = arith.constant 0 : index
      %c0_34 = arith.constant 0 : index
      %61 = vector.load %arg9[%c0_32, %c0_33, %c0_34] : memref<1x16x1xf32, #tpu.memory_space<vmem>>, vector<1x16x1xf32>
      %62 = vector.shape_cast %61 : vector<1x16x1xf32> to vector<16x1xf32>
      %63 = vector.shape_cast %60 : vector<16x1xf32> to vector<1x16x1xf32>
      tpu.vector_store %arg9[%c0_32, %c0_33, %c0_34], %63 {strides = array<i32>} : memref<1x16x1xf32, #tpu.memory_space<vmem>>, vector<1x16x1xf32>,
    } else {
    }
    %c0_13 = arith.constant 0 : index
    %c0_14 = arith.constant 0 : index
    %c0_15 = arith.constant 0 : index
    %27 = vector.load %arg7[%c0_13, %c0_14, %c0_15] : memref<1x16x1xf32, #tpu.memory_space<vmem>>, vector<1x16x1xf32>
    %28 = vector.shape_cast %27 : vector<1x16x1xf32> to vector<16x1xf32>
    %cst_16 = arith.constant dense<0xFF800000> : vector<16xf32>
    %29 = vector.multi_reduction <maximumf>, %23, %cst_16 [1] : vector<16x128xf32> to vector<16xf32>
    %30 = vector.shape_cast %29 : vector<16xf32> to vector<16x1xf32>
    %31 = arith.maximumf %28, %30 : vector<16x1xf32>
    %c0_17 = arith.constant 0 : index
    %c0_18 = arith.constant 0 : index
    %c0_19 = arith.constant 0 : index
    %32 = vector.load %arg8[%c0_17, %c0_18, %c0_19] : memref<1x16x1xf32, #tpu.memory_space<vmem>>, vector<1x16x1xf32>
    %33 = vector.shape_cast %32 : vector<1x16x1xf32> to vector<16x1xf32>
    %34 = arith.subf %28, %31 : vector<16x1xf32>
    %35 = math.exp %34 : vector<16x1xf32>
    %36 = arith.mulf %33, %35 : vector<16x1xf32>
    %37 = vector.broadcast %31 : vector<16x1xf32> to vector<16x128xf32>
    %38 = arith.subf %23, %37 : vector<16x128xf32>
    %39 = math.exp %38 : vector<16x128xf32>
    %cst_20 = arith.constant dense<0.000000e+00> : vector<16xf32>
    %40 = vector.multi_reduction <add>, %39, %cst_20 [1] : vector<16x128xf32> to vector<16xf32>
    %41 = vector.shape_cast %40 : vector<16xf32> to vector<16x1xf32>
    %42 = arith.addf %36, %41 : vector<16x1xf32>
    %c0_21 = arith.constant 0 : index
    %c0_22 = arith.constant 0 : index
    %c0_23 = arith.constant 0 : index
    %43 = vector.load %arg8[%c0_21, %c0_22, %c0_23] : memref<1x16x1xf32, #tpu.memory_space<vmem>>, vector<1x16x1xf32>
    %44 = vector.shape_cast %43 : vector<1x16x1xf32> to vector<16x1xf32>
    %45 = vector.shape_cast %42 : vector<16x1xf32> to vector<1x16x1xf32>
    tpu.vector_store %arg8[%c0_21, %c0_22, %c0_23], %45 {strides = array<i32>} : memref<1x16x1xf32, #tpu.memory_space<vmem>>, vector<1x16x1xf32>,
    %c0_24 = arith.constant 0 : index
    %c0_25 = arith.constant 0 : index
    %c0_26 = arith.constant 0 : index
    %46 = vector.load %arg7[%c0_24, %c0_25, %c0_26] : memref<1x16x1xf32, #tpu.memory_space<vmem>>, vector<1x16x1xf32>
    %47 = vector.shape_cast %46 : vector<1x16x1xf32> to vector<16x1xf32>
    %48 = vector.shape_cast %31 : vector<16x1xf32> to vector<1x16x1xf32>
    tpu.vector_store %arg7[%c0_24, %c0_25, %c0_26], %48 {strides = array<i32>} : memref<1x16x1xf32, #tpu.memory_space<vmem>>, vector<1x16x1xf32>,
    return
  }
  func.func @transform_0(%arg0: i32, %arg1: i32) -> (i32, i32) {
    %c0_i32 = arith.constant 0 : i32
    %c0_i32_0 = arith.constant 0 : i32
    %c0_i32_1 = arith.constant 0 : i32
    return %c0_i32, %c0_i32_0 : i32, i32
  }
  func.func @transform_1(%arg0: i32, %arg1: i32) -> (i32, i32) {
    %c1_i32 = arith.constant 1 : i32
    %0 = arith.muli %arg0, %c1_i32 : i32
    %1 = arith.addi %0, %arg1 : i32
    %c0_i32 = arith.constant 0 : i32
    %c0_i32_0 = arith.constant 0 : i32
    return %1, %c0_i32 : i32, i32
  }
  func.func @transform_2(%arg0: i32, %arg1: i32) -> (i32, i32) {
    %c0_i32 = arith.constant 0 : i32
    %c0_i32_0 = arith.constant 0 : i32
    %c0_i32_1 = arith.constant 0 : i32
    return %c0_i32, %c0_i32_0 : i32, i32
  }
  func.func @transform_3(%arg0: i32, %arg1: i32) -> (i32, i32) {
    %c0_i32 = arith.constant 0 : i32
    %c0_i32_0 = arith.constant 0 : i32
    %c0_i32_1 = arith.constant 0 : i32
    return %c0_i32, %c0_i32_0 : i32, i32
  }
  func.func @transform_4(%arg0: i32, %arg1: i32) -> (i32, i32) {
    %c1_i32 = arith.constant 1 : i32
    %0 = arith.muli %arg0, %c1_i32 : i32
    %1 = arith.addi %0, %arg1 : i32
    %c0_i32 = arith.constant 0 : i32
    %c0_i32_0 = arith.constant 0 : i32
    return %c0_i32, %1 : i32, i32
  }
  func.func @transform_5(%arg0: i32, %arg1: i32) -> (i32, i32, i32) {
    %c0_i32 = arith.constant 0 : i32
    %c0_i32_0 = arith.constant 0 : i32
    %c0_i32_1 = arith.constant 0 : i32
    return %arg0, %c0_i32, %c0_i32_0 : i32, i32, i32
  }
  func.func @transform_6(%arg0: i32, %arg1: i32) -> (i32, i32, i32) {
    %c0_i32 = arith.constant 0 : i32
    %c0_i32_0 = arith.constant 0 : i32
    %c0_i32_1 = arith.constant 0 : i32
    return %arg0, %c0_i32, %c0_i32_0 : i32, i32, i32
  }
  func.func @transform_7(%arg0: i32, %arg1: i32) -> (i32, i32, i32) {
    %c0_i32 = arith.constant 0 : i32
    %c0_i32_0 = arith.constant 0 : i32
    %c0_i32_1 = arith.constant 0 : i32
    return %arg0, %c0_i32, %c0_i32_0 : i32, i32, i32
  }
}

module attributes {stable_mosaic.version = 11 : i64} {
  func.func @_fused_kernel(%arg0: i32, %arg1: i32, %arg2: memref<16x128xbf16, #tpu.memory_space<vmem>>, %arg3: memref<128x128xbf16, #tpu.memory_space<vmem>>, %arg4: memref<128x128xbf16, #tpu.memory_space<vmem>>, %arg5: memref<1x128xf32, #tpu.memory_space<vmem>>, %arg6: memref<16x128xf32, #tpu.memory_space<vmem>>, %arg7: memref<1x16x1xf32, #tpu.memory_space<vmem>>, %arg8: memref<1x16x1xf32, #tpu.memory_space<vmem>>, %arg9: memref<1x16x1xf32, #tpu.memory_space<vmem>>, %arg10: memref<16x128xbf16, #tpu.memory_space<vmem>>) attributes {dimension_semantics = [#tpu.dimension_semantics<parallel>, #tpu.dimension_semantics<arbitrary>], iteration_bounds = array<i64: 1, 1>, scalar_prefetch = 0 : i64, scratch_operands = 1 : i64, tpu.core_type = #tpu.core_type<tc>, window_params = [{pipeline_mode = #tpu.pipeline_mode<synchronous>, transform_indices = @transform_0, window_bounds = array<i64: 16, 128>}, {transform_indices = @transform_1, window_bounds = array<i64: 128, 128>}, {pipeline_mode = #tpu.pipeline_mode<synchronous>, transform_indices = @transform_2, window_bounds = array<i64: 128, 128>}, {pipeline_mode = #tpu.pipeline_mode<synchronous>, transform_indices = @transform_3, window_bounds = array<i64: 1, 128>}, {transform_indices = @transform_4, window_bounds = array<i64: 16, 128>}, {transform_indices = @transform_5, window_bounds = array<i64: 1, 16, 1>}, {transform_indices = @transform_6, window_bounds = array<i64: 1, 16, 1>}, {transform_indices = @transform_7, window_bounds = array<i64: 1, 16, 1>}]} {
    %c1_i32 = arith.constant 1 : i32
    %0 = arith.muli %arg0, %c1_i32 : i32
    %1 = arith.addi %0, %arg1 : i32
    %c128_i32 = arith.constant 128 : i32
    %2 = arith.muli %1, %c128_i32 : i32
    %c0_i32 = arith.constant 0 : i32
    %3 = arith.cmpi eq, %arg1, %c0_i32 : i32
    %4 = arith.extui %3 : i1 to i32
    %c0_i32_0 = arith.constant 0 : i32
    %5 = arith.cmpi ne, %4, %c0_i32_0 : i32
    scf.if %5 {
      %c0_27 = arith.constant 0 : index
      %c0_28 = arith.constant 0 : index
      %49 = vector.load %arg2[%c0_27, %c0_28] : memref<16x128xbf16, #tpu.memory_space<vmem>>, vector<16x128xbf16>
      %c0_29 = arith.constant 0 : index
      %c0_30 = arith.constant 0 : index
      %50 = vector.load %arg4[%c0_29, %c0_30] : memref<128x128xbf16, #tpu.memory_space<vmem>>, vector<128x128xbf16>
      %cst_31 = arith.constant dense<0.000000e+00> : vector<16x128xf32>
      %51 = tpu.matmul %49, %50, %cst_31 {dimension_numbers = #tpu.dot_dimension_numbers<[1], [0], [0], [1], [0, 0, 1, 1], [], []>} : vector<16x128xbf16>, vector<128x128xbf16>, vector<16x128xf32> -> vector<16x128xf32>
      %c0_32 = arith.constant 0 : index
      %c0_33 = arith.constant 0 : index
      %52 = vector.load %arg5[%c0_32, %c0_33] : memref<1x128xf32, #tpu.memory_space<vmem>>, vector<1x128xf32>
      %53 = vector.broadcast %52 : vector<1x128xf32> to vector<16x128xf32>
      %54 = arith.addf %51, %53 : vector<16x128xf32>
      %55 = math.tanh %54 : vector<16x128xf32>
      %56 = arith.truncf %55 : vector<16x128xf32> to vector<16x128xbf16>
      %c0_34 = arith.constant 0 : index
      %c0_35 = arith.constant 0 : index
      %57 = vector.load %arg10[%c0_34, %c0_35] : memref<16x128xbf16, #tpu.memory_space<vmem>>, vector<16x128xbf16>
      tpu.vector_store %arg10[%c0_34, %c0_35], %56 {strides = array<i32>} : memref<16x128xbf16, #tpu.memory_space<vmem>>, vector<16x128xbf16>,
      %cst_36 = arith.constant -1.000000e+30 : f32
      %58 = vector.broadcast %cst_36 : f32 to vector<1x16x1xf32>
      %c0_37 = arith.constant 0 : index
      %c0_38 = arith.constant 0 : index
      %c0_39 = arith.constant 0 : index
      %59 = vector.load %arg7[%c0_37, %c0_38, %c0_39] : memref<1x16x1xf32, #tpu.memory_space<vmem>>, vector<1x16x1xf32>
      tpu.vector_store %arg7[%c0_37, %c0_38, %c0_39], %58 {strides = array<i32>} : memref<1x16x1xf32, #tpu.memory_space<vmem>>, vector<1x16x1xf32>,
      %cst_40 = arith.constant 0.000000e+00 : f32
      %60 = vector.broadcast %cst_40 : f32 to vector<1x16x1xf32>
      %c0_41 = arith.constant 0 : index
      %c0_42 = arith.constant 0 : index
      %c0_43 = arith.constant 0 : index
      %61 = vector.load %arg8[%c0_41, %c0_42, %c0_43] : memref<1x16x1xf32, #tpu.memory_space<vmem>>, vector<1x16x1xf32>
      tpu.vector_store %arg8[%c0_41, %c0_42, %c0_43], %60 {strides = array<i32>} : memref<1x16x1xf32, #tpu.memory_space<vmem>>, vector<1x16x1xf32>,
      %cst_44 = arith.constant 0.000000e+00 : f32
      %62 = vector.broadcast %cst_44 : f32 to vector<1x16x1xf32>
      %c0_45 = arith.constant 0 : index
      %c0_46 = arith.constant 0 : index
      %c0_47 = arith.constant 0 : index
      %63 = vector.load %arg9[%c0_45, %c0_46, %c0_47] : memref<1x16x1xf32, #tpu.memory_space<vmem>>, vector<1x16x1xf32>
      tpu.vector_store %arg9[%c0_45, %c0_46, %c0_47], %62 {strides = array<i32>} : memref<1x16x1xf32, #tpu.memory_space<vmem>>, vector<1x16x1xf32>,
    } else {
    }
    %c0 = arith.constant 0 : index
    %c0_1 = arith.constant 0 : index
    %6 = vector.load %arg3[%c0, %c0_1] : memref<128x128xbf16, #tpu.memory_space<vmem>>, vector<128x128xbf16>
    %c0_2 = arith.constant 0 : index
    %c0_3 = arith.constant 0 : index
    %7 = vector.load %arg4[%c0_2, %c0_3] : memref<128x128xbf16, #tpu.memory_space<vmem>>, vector<128x128xbf16>
    %cst = arith.constant dense<0.000000e+00> : vector<128x128xf32>
    %8 = tpu.matmul %6, %7, %cst {dimension_numbers = #tpu.dot_dimension_numbers<[1], [0], [0], [1], [0, 0, 1, 1], [], []>} : vector<128x128xbf16>, vector<128x128xbf16>, vector<128x128xf32> -> vector<128x128xf32>
    %c0_4 = arith.constant 0 : index
    %c0_5 = arith.constant 0 : index
    %9 = vector.load %arg5[%c0_4, %c0_5] : memref<1x128xf32, #tpu.memory_space<vmem>>, vector<1x128xf32>
    %10 = vector.broadcast %9 : vector<1x128xf32> to vector<128x128xf32>
    %11 = arith.addf %8, %10 : vector<128x128xf32>
    %12 = math.tanh %11 : vector<128x128xf32>
    %13 = arith.truncf %12 : vector<128x128xf32> to vector<128x128xbf16>
    %c0_6 = arith.constant 0 : index
    %c0_7 = arith.constant 0 : index
    %14 = vector.load %arg10[%c0_6, %c0_7] : memref<16x128xbf16, #tpu.memory_space<vmem>>, vector<16x128xbf16>
    %cst_8 = arith.constant dense<0.000000e+00> : vector<16x128xf32>
    %15 = tpu.matmul %14, %13, %cst_8 {dimension_numbers = #tpu.dot_dimension_numbers<[1], [1], [0], [0], [0, 0, 1, 0], [], []>} : vector<16x128xbf16>, vector<128x128xbf16>, vector<16x128xf32> -> vector<16x128xf32>
    %c0_9 = arith.constant 0 : index
    %c0_10 = arith.constant 0 : index
    %16 = vector.load %arg6[%c0_9, %c0_10] : memref<16x128xf32, #tpu.memory_space<vmem>>, vector<16x128xf32>
    tpu.vector_store %arg6[%c0_9, %c0_10], %15 {strides = array<i32>} : memref<16x128xf32, #tpu.memory_space<vmem>>, vector<16x128xf32>,
    %17 = tpu.iota {dimensions = array<i32: 1>} : vector<16x128xi32>
    %18 = vector.broadcast %2 : i32 to vector<16x128xi32>
    %19 = arith.addi %17, %18 : vector<16x128xi32>
    %c8_i32 = arith.constant 8 : i32
    %20 = vector.broadcast %c8_i32 : i32 to vector<16x128xi32>
    %21 = arith.cmpi slt, %19, %20 : vector<16x128xi32>
    %cst_11 = arith.constant -1.000000e+30 : f32
    %22 = vector.broadcast %cst_11 : f32 to vector<16x128xf32>
    %23 = arith.select %21, %15, %22 : vector<16x128xi1>, vector<16x128xf32>
    %c2_i32 = arith.constant 2 : i32
    %24 = arith.cmpi slt, %2, %c2_i32 : i32
    %25 = arith.extui %24 : i1 to i32
    %c0_i32_12 = arith.constant 0 : i32
    %26 = arith.cmpi ne, %25, %c0_i32_12 : i32
    scf.if %26 {
      %49 = tpu.iota {dimensions = array<i32: 1>} : vector<16x128xi32>
      %50 = vector.broadcast %2 : i32 to vector<16x128xi32>
      %51 = arith.addi %49, %50 : vector<16x128xi32>
      %52 = tpu.iota {dimensions = array<i32: 0>} : vector<16x128xi32>
      %c0_27 = arith.constant 0 : index
      %c0_28 = arith.constant 0 : index
      %c0_29 = arith.constant 0 : index
      %53 = vector.load %arg9[%c0_27, %c0_28, %c0_29] : memref<1x16x1xf32, #tpu.memory_space<vmem>>, vector<1x16x1xf32>
      %54 = vector.shape_cast %53 : vector<1x16x1xf32> to vector<16x1xf32>
      %55 = arith.cmpi eq, %51, %52 : vector<16x128xi32>
      %cst_30 = arith.constant 0.000000e+00 : f32
      %56 = vector.broadcast %cst_30 : f32 to vector<16x128xf32>
      %57 = arith.select %55, %23, %56 : vector<16x128xi1>, vector<16x128xf32>
      %cst_31 = arith.constant dense<0.000000e+00> : vector<16xf32>
      %58 = vector.multi_reduction <add>, %57, %cst_31 [1] : vector<16x128xf32> to vector<16xf32>
      %59 = vector.shape_cast %58 : vector<16xf32> to vector<16x1xf32>
      %60 = arith.addf %54, %59 : vector<16x1xf32>
      %c0_32 = arith.constant 0 : index
      %c0_33 = arith.constant 0 : index
      %c0_34 = arith.constant 0 : index
      %61 = vector.load %arg9[%c0_32, %c0_33, %c0_34] : memref<1x16x1xf32, #tpu.memory_space<vmem>>, vector<1x16x1xf32>
      %62 = vector.shape_cast %61 : vector<1x16x1xf32> to vector<16x1xf32>
      %63 = vector.shape_cast %60 : vector<16x1xf32> to vector<1x16x1xf32>
      tpu.vector_store %arg9[%c0_32, %c0_33, %c0_34], %63 {strides = array<i32>} : memref<1x16x1xf32, #tpu.memory_space<vmem>>, vector<1x16x1xf32>,
    } else {
    }
    %c0_13 = arith.constant 0 : index
    %c0_14 = arith.constant 0 : index
    %c0_15 = arith.constant 0 : index
    %27 = vector.load %arg7[%c0_13, %c0_14, %c0_15] : memref<1x16x1xf32, #tpu.memory_space<vmem>>, vector<1x16x1xf32>
    %28 = vector.shape_cast %27 : vector<1x16x1xf32> to vector<16x1xf32>
    %cst_16 = arith.constant dense<0xFF800000> : vector<16xf32>
    %29 = vector.multi_reduction <maximumf>, %23, %cst_16 [1] : vector<16x128xf32> to vector<16xf32>
    %30 = vector.shape_cast %29 : vector<16xf32> to vector<16x1xf32>
    %31 = arith.maximumf %28, %30 : vector<16x1xf32>
    %c0_17 = arith.constant 0 : index
    %c0_18 = arith.constant 0 : index
    %c0_19 = arith.constant 0 : index
    %32 = vector.load %arg8[%c0_17, %c0_18, %c0_19] : memref<1x16x1xf32, #tpu.memory_space<vmem>>, vector<1x16x1xf32>
    %33 = vector.shape_cast %32 : vector<1x16x1xf32> to vector<16x1xf32>
    %34 = arith.subf %28, %31 : vector<16x1xf32>
    %35 = math.exp %34 : vector<16x1xf32>
    %36 = arith.mulf %33, %35 : vector<16x1xf32>
    %37 = vector.broadcast %31 : vector<16x1xf32> to vector<16x128xf32>
    %38 = arith.subf %23, %37 : vector<16x128xf32>
    %39 = math.exp %38 : vector<16x128xf32>
    %cst_20 = arith.constant dense<0.000000e+00> : vector<16xf32>
    %40 = vector.multi_reduction <add>, %39, %cst_20 [1] : vector<16x128xf32> to vector<16xf32>
    %41 = vector.shape_cast %40 : vector<16xf32> to vector<16x1xf32>
    %42 = arith.addf %36, %41 : vector<16x1xf32>
    %c0_21 = arith.constant 0 : index
    %c0_22 = arith.constant 0 : index
    %c0_23 = arith.constant 0 : index
    %43 = vector.load %arg8[%c0_21, %c0_22, %c0_23] : memref<1x16x1xf32, #tpu.memory_space<vmem>>, vector<1x16x1xf32>
    %44 = vector.shape_cast %43 : vector<1x16x1xf32> to vector<16x1xf32>
    %45 = vector.shape_cast %42 : vector<16x1xf32> to vector<1x16x1xf32>
    tpu.vector_store %arg8[%c0_21, %c0_22, %c0_23], %45 {strides = array<i32>} : memref<1x16x1xf32, #tpu.memory_space<vmem>>, vector<1x16x1xf32>,
    %c0_24 = arith.constant 0 : index
    %c0_25 = arith.constant 0 : index
    %c0_26 = arith.constant 0 : index
    %46 = vector.load %arg7[%c0_24, %c0_25, %c0_26] : memref<1x16x1xf32, #tpu.memory_space<vmem>>, vector<1x16x1xf32>
    %47 = vector.shape_cast %46 : vector<1x16x1xf32> to vector<16x1xf32>
    %48 = vector.shape_cast %31 : vector<16x1xf32> to vector<1x16x1xf32>
    tpu.vector_store %arg7[%c0_24, %c0_25, %c0_26], %48 {strides = array<i32>} : memref<1x16x1xf32, #tpu.memory_space<vmem>>, vector<1x16x1xf32>,
    return
  }
  func.func @transform_0(%arg0: i32, %arg1: i32) -> (i32, i32) {
    %c0_i32 = arith.constant 0 : i32
    %c0_i32_0 = arith.constant 0 : i32
    %c0_i32_1 = arith.constant 0 : i32
    return %c0_i32, %c0_i32_0 : i32, i32
  }
  func.func @transform_1(%arg0: i32, %arg1: i32) -> (i32, i32) {
    %c1_i32 = arith.constant 1 : i32
    %0 = arith.muli %arg0, %c1_i32 : i32
    %1 = arith.addi %0, %arg1 : i32
    %c0_i32 = arith.constant 0 : i32
    %c0_i32_0 = arith.constant 0 : i32
    return %1, %c0_i32 : i32, i32
  }
  func.func @transform_2(%arg0: i32, %arg1: i32) -> (i32, i32) {
    %c0_i32 = arith.constant 0 : i32
    %c0_i32_0 = arith.constant 0 : i32
    %c0_i32_1 = arith.constant 0 : i32
    return %c0_i32, %c0_i32_0 : i32, i32
  }
  func.func @transform_3(%arg0: i32, %arg1: i32) -> (i32, i32) {
    %c0_i32 = arith.constant 0 : i32
    %c0_i32_0 = arith.constant 0 : i32
    %c0_i32_1 = arith.constant 0 : i32
    return %c0_i32, %c0_i32_0 : i32, i32
  }
  func.func @transform_4(%arg0: i32, %arg1: i32) -> (i32, i32) {
    %c1_i32 = arith.constant 1 : i32
    %0 = arith.muli %arg0, %c1_i32 : i32
    %1 = arith.addi %0, %arg1 : i32
    %c0_i32 = arith.constant 0 : i32
    %c0_i32_0 = arith.constant 0 : i32
    return %c0_i32, %1 : i32, i32
  }
  func.func @transform_5(%arg0: i32, %arg1: i32) -> (i32, i32, i32) {
    %c0_i32 = arith.constant 0 : i32
    %c0_i32_0 = arith.constant 0 : i32
    %c0_i32_1 = arith.constant 0 : i32
    return %arg0, %c0_i32, %c0_i32_0 : i32, i32, i32
  }
  func.func @transform_6(%arg0: i32, %arg1: i32) -> (i32, i32, i32) {
    %c0_i32 = arith.constant 0 : i32
    %c0_i32_0 = arith.constant 0 : i32
    %c0_i32_1 = arith.constant 0 : i32
    return %arg0, %c0_i32, %c0_i32_0 : i32, i32, i32
  }
  func.func @transform_7(%arg0: i32, %arg1: i32) -> (i32, i32, i32) {
    %c0_i32 = arith.constant 0 : i32
    %c0_i32_0 = arith.constant 0 : i32
    %c0_i32_1 = arith.constant 0 : i32
    return %arg0, %c0_i32, %c0_i32_0 : i32, i32, i32
  }
}

</mosaic_0001>

<llo_original>
// kernel: tpu_custom_call.1
$region0: #{tpu_custom_call.1}
  #allocation0 [shape = 'u32[]', space=smem, size = 0x4, offset = 0x4, fixed_abs, tag = 'smem constant byte address 0x4 - core index']
  #allocation1 [shape = 'u32[144,128]{1,0:T(1,128)}', space=vmem, size = 0x12000, scoped, tag = 'internal scratch']
  #allocation2 [shape = 'bf16[16,128]{1,0:T(16,128)(2,1)}', space=vmem, size = 0x1000, scoped, tag = 'scratch operand']
  %s0 = inlined_call_operand.hbm [shape: bf16[16,128], index: 0, kind: input, shape index: {}]
  %s1 = inlined_call_operand.hbm [shape: bf16[128,128], index: 1, kind: input, shape index: {}]
  %s2 = inlined_call_operand.hbm [shape: bf16[128,128], index: 2, kind: input, shape index: {}]
  %s3 = inlined_call_operand.vmem [shape: f32[1,128], index: 3, kind: input, shape index: {}]
  %s4 = inlined_call_operand.hbm [shape: f32[16,128], index: 4, kind: output, shape index: {0}]
  %s5 = inlined_call_operand.vmem [shape: f32[1,16,1], index: 5, kind: output, shape index: {1}]
  %s6 = inlined_call_operand.vmem [shape: f32[1,16,1], index: 6, kind: output, shape index: {2}]
  %s7 = inlined_call_operand.vmem [shape: f32[1,16,1], index: 7, kind: output, shape index: {3}]
  %8 = xla_tuple %s4, %s5, %s6, %s7
  %s9 = sld [smem:[#allocation0]]
  $region70: #{tpu_custom_call.1} parent=0
    _
  %s11 = ssub.s32 1, %s9
  %s12 = scalar_select 0, %s11, %s9
  $region1: #{tpu_custom_call.1} parent=0
    #allocation3 [shape = 'u8[4096]{0}', space=vmem, size = 0x1000, scoped, tag = 'input window, operand 0, single buffered']
    #allocation4 [shape = 's32[1]{0}', space=sflag, size = 0x4, scoped, tag = 'scoped memory for tpu_custom_call.1']
    #allocation5 [shape = 's32[1]{0}', space=sflag, size = 0x4, scoped, tag = 'scoped memory for tpu_custom_call.1']
    #allocation6 [shape = 'u8[32768]{0}', space=vmem, size = 0x8000, scoped, tag = 'input window, operand 1, single buffered']
    #allocation7 [shape = 's32[1]{0}', space=sflag, size = 0x4, scoped, tag = 'scoped memory for tpu_custom_call.1']
    #allocation8 [shape = 'u8[32768]{0}', space=vmem, size = 0x8000, scoped, tag = 'input window, operand 2, single buffered']
    #allocation9 [shape = 'u8[8192]{0}', space=vmem, size = 0x2000, scoped, tag = 'output window, operand 0, single buffered']
    %13 = vsyncpa [#allocation4], 0
    %14 = vsyncpa [#allocation7], 0
    %15 = vsyncpa [#allocation5], 0
    // Predicated region
    $region2: #{tpu_custom_call.1} parent=1 // pred_check
      _
    $region3: #{tpu_custom_call.1} parent=1 // pred_check_branch
      %17 = sbr.rel (0) target = $region5
    $region4: #{tpu_custom_call.1} parent=1 // pred_region
      %s19 = ssub.s32 128, 128
      %20 = vsyncadd [#allocation4], %s19
      %s21 = sshll.u32 [#allocation3], 4
      %s22 = int_to_ptr.vmem [resolvable:$true] %s21
      %27 = dma.hbm_to_vmem [thread:$0]  %s0, 128, %s22, [#allocation4], 64, 64, 4
    $region5: #{tpu_custom_call.1} parent=1 // pred_fallthru
      _
    // Predicated region
    $region6: #{tpu_custom_call.1} parent=1 // pred_check
      _
    $region7: #{tpu_custom_call.1} parent=1 // pred_check_branch
      %29 = sbr.rel (0) target = $region9
    $region8: #{tpu_custom_call.1} parent=1 // pred_region
      %s30 = sadd.s32 0, 0
      %s31 = smul.u32 16, %s30
      %s33 = ssub.s32 1024, 1024
      %34 = vsyncadd [#allocation7], %s33
      %s35 = smul.addr %s31, 64
      %s36 = scalar_lea.hbm %s1, %s35
      %s37 = sshll.u32 [#allocation6], 4
      %s38 = int_to_ptr.vmem [resolvable:$true] %s37
      %43 = dma.hbm_to_vmem [thread:$0]  %s36, 1024, %s38, [#allocation7], 64, 64, 4
    $region9: #{tpu_custom_call.1} parent=1 // pred_fallthru
      _
    // Predicated region
    $region10: #{tpu_custom_call.1} parent=1 // pred_check
      _
    $region11: #{tpu_custom_call.1} parent=1 // pred_check_branch
      %45 = sbr.rel (0) target = $region13
    $region12: #{tpu_custom_call.1} parent=1 // pred_region
      %s47 = ssub.s32 1024, 1024
      %48 = vsyncadd [#allocation7], %s47
      %s49 = sshll.u32 [#allocation8], 4
      %s50 = int_to_ptr.vmem [resolvable:$true] %s49
      %55 = dma.hbm_to_vmem [thread:$0]  %s2, 1024, %s50, [#allocation7], 64, 64, 4
    $region13: #{tpu_custom_call.1} parent=1 // pred_fallthru
      _
    // Predicated region
    $region14: #{tpu_custom_call.1} parent=1 // pred_check
      _
    $region15: #{tpu_custom_call.1} parent=1 // pred_check_branch
      %57 = sbr.rel (0) target = $region17
    $region16: #{tpu_custom_call.1} parent=1 // pred_region
      _
    $region17: #{tpu_custom_call.1} parent=1 // pred_fallthru
      _
    // Predicated region
    $region18: #{tpu_custom_call.1} parent=1 // pred_check
      _
    $region19: #{tpu_custom_call.1} parent=1 // pred_check_branch
      %59 = sbr.rel (0) target = $region21
    $region20: #{tpu_custom_call.1} parent=1 // pred_region
      %60 = dma.done [#allocation4], 128
    $region21: #{tpu_custom_call.1} parent=1 // pred_fallthru
      _
    // Predicated region
    $region22: #{tpu_custom_call.1} parent=1 // pred_check
      _
    $region23: #{tpu_custom_call.1} parent=1 // pred_check_branch
      %62 = sbr.rel (0) target = $region25
    $region24: #{tpu_custom_call.1} parent=1 // pred_region
      %63 = dma.done [#allocation7], 1024
    $region25: #{tpu_custom_call.1} parent=1 // pred_fallthru
      _
    // Predicated region
    $region26: #{tpu_custom_call.1} parent=1 // pred_check
      _
    $region27: #{tpu_custom_call.1} parent=1 // pred_check_branch
      %65 = sbr.rel (0) target = $region29
    $region28: #{tpu_custom_call.1} parent=1 // pred_region
      %66 = dma.done [#allocation7], 1024
    $region29: #{tpu_custom_call.1} parent=1 // pred_fallthru
      _
    %s67 = sadd.s32 0, 0
    %s68 = smul.u32 16, %s67
    %s69 = sadd.s32 0, 0
    %s71 = sadd.s32 0, 0
    %s72 = smul.u32 %s71, 128
    %p73 = scmp.eq.s32.totalorder 0, 0
    // Predicated region
    $region30: #{tpu_custom_call.1} parent=1 // pred_check
      %p74 = pneg %p73
    $region31: #{tpu_custom_call.1} parent=1 // pred_check_branch
      %76 = sbr.rel (%p74) target = $region33
    $region32: #{tpu_custom_call.1} parent=1 // pred_region
      %v77 = vld [vmem:[#allocation3] sm:$0xf]
      %v78 = vld [vmem:[#allocation3 + $0x4] sm:$0xf]
      %v79 = vld [vmem:[#allocation8] sm:$0xf]
      %v80 = vld [vmem:[#allocation8 + $0x4] sm:$0xf]
      %v81 = vld [vmem:[#allocation8 + $0x8] sm:$0xf]
      %v82 = vld [vmem:[#allocation8 + $0xc] sm:$0xf]
      %v83 = vld [vmem:[#allocation8 + $0x10] sm:$0xf]
      %v84 = vld [vmem:[#allocation8 + $0x14] sm:$0xf]
      %v85 = vld [vmem:[#allocation8 + $0x18] sm:$0xf]
      %v86 = vld [vmem:[#allocation8 + $0x1c] sm:$0xf]
      %v87 = vld [vmem:[#allocation8 + $0x20] sm:$0xf]
      %v88 = vld [vmem:[#allocation8 + $0x24] sm:$0xf]
      %v89 = vld [vmem:[#allocation8 + $0x28] sm:$0xf]
      %v90 = vld [vmem:[#allocation8 + $0x2c] sm:$0xf]
      %v91 = vld [vmem:[#allocation8 + $0x30] sm:$0xf]
      %v92 = vld [vmem:[#allocation8 + $0x34] sm:$0xf]
      %v93 = vld [vmem:[#allocation8 + $0x38] sm:$0xf]
      %v94 = vld [vmem:[#allocation8 + $0x3c] sm:$0xf]
      %v95 = vld [vmem:[%s3] sm:$0x1]
      %v97 = vlaneseq
      %v98 = vshrl.u32 %v97, 7
      %v99 = vsub.s32 0, %v98
      %v100 = vrot.slane %v95, %v99
      %v104 = vunpack.c.l.b16 %v77
      %v105 = vunpack.c.l.b16 %v78
      %v106 = vpack.c.b16 %v105, %v104
      %v124 = vunpack.c.l.b16 %v79
      %v125 = vunpack.c.l.b16 %v80
      %v126 = vunpack.c.l.b16 %v81
      %v127 = vunpack.c.l.b16 %v82
      %v128 = vunpack.c.l.b16 %v83
      %v129 = vunpack.c.l.b16 %v84
      %v130 = vunpack.c.l.b16 %v85
      %v131 = vunpack.c.l.b16 %v86
      %v132 = vunpack.c.l.b16 %v87
      %v133 = vunpack.c.l.b16 %v88
      %v134 = vunpack.c.l.b16 %v89
      %v135 = vunpack.c.l.b16 %v90
      %v136 = vunpack.c.l.b16 %v91
      %v137 = vunpack.c.l.b16 %v92
      %v138 = vunpack.c.l.b16 %v93
      %v139 = vunpack.c.l.b16 %v94
      %v140 = vpack.c.b16 %v125, %v124
      %v141 = vpack.c.b16 %v127, %v126
      %v142 = vpack.c.b16 %v129, %v128
      %v143 = vpack.c.b16 %v131, %v130
      %v144 = vpack.c.b16 %v133, %v132
      %v145 = vpack.c.b16 %v135, %v134
      %v146 = vpack.c.b16 %v137, %v136
      %v147 = vpack.c.b16 %v139, %v138
      %156 = vmatprep.subr.bf16.mxu0 0
      %157 = vmatpush1.bf16.msra.mxu0 %v140
      %158 = vmatprep.subr.bf16.mxu0 0
      %159 = vmatpush1.bf16.msra.mxu0 %v141
      %160 = vmatprep.subr.bf16.mxu0 0
      %161 = vmatpush1.bf16.msra.mxu0 %v142
      %162 = vmatprep.subr.bf16.mxu0 0
      %163 = vmatpush1.bf16.msra.mxu0 %v143
      %164 = vmatprep.subr.bf16.mxu0 0
      %165 = vmatpush1.bf16.msra.mxu0 %v144
      %166 = vmatprep.subr.bf16.mxu0 0
      %167 = vmatpush1.bf16.msra.mxu0 %v145
      %168 = vmatprep.subr.bf16.mxu0 0
      %169 = vmatpush1.bf16.msra.mxu0 %v146
      %170 = vmatprep.subr.bf16.mxu0 0
      %171 = vmatpush1.bf16.msra.mxu0 %v147
      %172 = vmatprep.subr.bf16.mxu0 0
      %173 = vmatpush1.bf16.msra.mxu0 0
      %174 = vmatprep.subr.bf16.mxu0 0
      %175 = vmatpush1.bf16.msra.mxu0 0
      %176 = vmatprep.subr.bf16.mxu0 0
      %177 = vmatpush1.bf16.msra.mxu0 0
      %178 = vmatprep.subr.bf16.mxu0 0
      %179 = vmatpush1.bf16.msra.mxu0 0
      %180 = vmatprep.subr.bf16.mxu0 0
      %181 = vmatpush1.bf16.msra.mxu0 0
      %182 = vmatprep.subr.bf16.mxu0 0
      %183 = vmatpush1.bf16.msra.mxu0 0
      %184 = vmatprep.subr.bf16.mxu0 0
      %185 = vmatpush1.bf16.msra.mxu0 0
      %186 = vmatprep.subr.bf16.mxu0 0
      %187 = vmatpush1.bf16.msra.mxu0 0
      %188 = vmatprep.mubr.bf16.mxu0 0
      %189 = vmatmul.mubr.bf16.gmra.mrb[0].mxu0 %v106
      %v190 = vpop.f32.mrb[0].mxu0
      %v191 = vadd.f32 %v100, %v190
      %v192 = vpop.f32.mrb[0].mxu0
      %v193 = vpop.f32.mrb[0].mxu0
      %v194 = vadd.f32 %v100, %v193
      %v195 = vpop.f32.mrb[0].mxu0
      %196 = vdwg.mxu0
      %v197 = vtanh.pop %v191
      %v198 = vtanh.pop %v194
      %v199 = vpack.c.bf16 %v198, %v197
      %200 = vst [vmem:[#allocation2] sm:$0xff] %v199
      %vm201 = vcmask 7168
      %202 = vst.msk [vmem:[%s5] sm:$0xff] %vm201, -1e+30
      %203 = vst.msk [vmem:[%s5 + $0x8] sm:$0xff] %vm201, -1e+30
      %204 = vst.msk [vmem:[%s6] sm:$0xff] %vm201, 0.0
      %205 = vst.msk [vmem:[%s6 + $0x8] sm:$0xff] %vm201, 0.0
      %206 = vst.msk [vmem:[%s7] sm:$0xff] %vm201, 0.0
      %207 = vst.msk [vmem:[%s7 + $0x8] sm:$0xff] %vm201, 0.0
    $region33: #{tpu_custom_call.1} parent=1 // pred_fallthru
      _
    %v208 = vld [vmem:[#allocation6] sm:$0xf]
    %v209 = vld [vmem:[#allocation6 + $0x4] sm:$0xf]
    %v210 = vld [vmem:[#allocation6 + $0x8] sm:$0xf]
    %v211 = vld [vmem:[#allocation6 + $0xc] sm:$0xf]
    %v212 = vld [vmem:[#allocation6 + $0x10] sm:$0xf]
    %v213 = vld [vmem:[#allocation6 + $0x14] sm:$0xf]
    %v214 = vld [vmem:[#allocation6 + $0x18] sm:$0xf]
    %v215 = vld [vmem:[#allocation6 + $0x1c] sm:$0xf]
    %v216 = vld [vmem:[#allocation6 + $0x20] sm:$0xf]
    %v217 = vld [vmem:[#allocation6 + $0x24] sm:$0xf]
    %v218 = vld [vmem:[#allocation6 + $0x28] sm:$0xf]
    %v219 = vld [vmem:[#allocation6 + $0x2c] sm:$0xf]
    %v220 = vld [vmem:[#allocation6 + $0x30] sm:$0xf]
    %v221 = vld [vmem:[#allocation6 + $0x34] sm:$0xf]
    %v222 = vld [vmem:[#allocation6 + $0x38] sm:$0xf]
    %v223 = vld [vmem:[#allocation6 + $0x3c] sm:$0xf]
    %v224 = vld [vmem:[#allocation8] sm:$0xf]
    %v225 = vld [vmem:[#allocation8 + $0x4] sm:$0xf]
    %v226 = vld [vmem:[#allocation8 + $0x8] sm:$0xf]
    %v227 = vld [vmem:[#allocation8 + $0xc] sm:$0xf]
    %v228 = vld [vmem:[#allocation8 + $0x10] sm:$0xf]
    %v229 = vld [vmem:[#allocation8 + $0x14] sm:$0xf]
    %v230 = vld [vmem:[#allocation8 + $0x18] sm:$0xf]
    %v231 = vld [vmem:[#allocation8 + $0x1c] sm:$0xf]
    %v232 = vld [vmem:[#allocation8 + $0x20] sm:$0xf]
    %v233 = vld [vmem:[#allocation8 + $0x24] sm:$0xf]
    %v234 = vld [vmem:[#allocation8 + $0x28] sm:$0xf]
    %v235 = vld [vmem:[#allocation8 + $0x2c] sm:$0xf]
    %v236 = vld [vmem:[#allocation8 + $0x30] sm:$0xf]
    %v237 = vld [vmem:[#allocation8 + $0x34] sm:$0xf]
    %v238 = vld [vmem:[#allocation8 + $0x38] sm:$0xf]
    %v239 = vld [vmem:[#allocation8 + $0x3c] sm:$0xf]
    %v240 = vld [vmem:[%s3] sm:$0x1]
    %v242 = vlaneseq
    %v243 = vshrl.u32 %v242, 7
    %v244 = vsub.s32 0, %v243
    %v245 = vrot.slane %v240, %v244
    %v263 = vunpack.c.l.b16 %v208
    %v264 = vunpack.c.l.b16 %v209
    %v265 = vunpack.c.l.b16 %v210
    %v266 = vunpack.c.l.b16 %v211
    %v267 = vunpack.c.l.b16 %v212
    %v268 = vunpack.c.l.b16 %v213
    %v269 = vunpack.c.l.b16 %v214
    %v270 = vunpack.c.l.b16 %v215
    %v271 = vunpack.c.l.b16 %v216
    %v272 = vunpack.c.l.b16 %v217
    %v273 = vunpack.c.l.b16 %v218
    %v274 = vunpack.c.l.b16 %v219
    %v275 = vunpack.c.l.b16 %v220
    %v276 = vunpack.c.l.b16 %v221
    %v277 = vunpack.c.l.b16 %v222
    %v278 = vunpack.c.l.b16 %v223
    %v279 = vpack.c.b16 %v264, %v263
    %v280 = vpack.c.b16 %v266, %v265
    %v281 = vpack.c.b16 %v268, %v267
    %v282 = vpack.c.b16 %v270, %v269
    %v283 = vpack.c.b16 %v272, %v271
    %v284 = vpack.c.b16 %v274, %v273
    %v285 = vpack.c.b16 %v276, %v275
    %v286 = vpack.c.b16 %v278, %v277
    %v311 = vunpack.c.l.b16 %v224
    %v312 = vunpack.c.l.b16 %v225
    %v313 = vunpack.c.l.b16 %v226
    %v314 = vunpack.c.l.b16 %v227
    %v315 = vunpack.c.l.b16 %v228
    %v316 = vunpack.c.l.b16 %v229
    %v317 = vunpack.c.l.b16 %v230
    %v318 = vunpack.c.l.b16 %v231
    %v319 = vunpack.c.l.b16 %v232
    %v320 = vunpack.c.l.b16 %v233
    %v321 = vunpack.c.l.b16 %v234
    %v322 = vunpack.c.l.b16 %v235
    %v323 = vunpack.c.l.b16 %v236
    %v324 = vunpack.c.l.b16 %v237
    %v325 = vunpack.c.l.b16 %v238
    %v326 = vunpack.c.l.b16 %v239
    %v327 = vpack.c.b16 %v312, %v311
    %v328 = vpack.c.b16 %v314, %v313
    %v329 = vpack.c.b16 %v316, %v315
    %v330 = vpack.c.b16 %v318, %v317
    %v331 = vpack.c.b16 %v320, %v319
    %v332 = vpack.c.b16 %v322, %v321
    %v333 = vpack.c.b16 %v324, %v323
    %v334 = vpack.c.b16 %v326, %v325
    %343 = vmatprep.subr.bf16.mxu0 0
    %344 = vmatpush1.bf16.msra.mxu0 %v327
    %345 = vmatprep.subr.bf16.mxu0 0
    %346 = vmatpush1.bf16.msra.mxu0 %v328
    %347 = vmatprep.subr.bf16.mxu0 0
    %348 = vmatpush1.bf16.msra.mxu0 %v329
    %349 = vmatprep.subr.bf16.mxu0 0
    %350 = vmatpush1.bf16.msra.mxu0 %v330
    %351 = vmatprep.subr.bf16.mxu0 0
    %352 = vmatpush1.bf16.msra.mxu0 %v331
    %353 = vmatprep.subr.bf16.mxu0 0
    %354 = vmatpush1.bf16.msra.mxu0 %v332
    %355 = vmatprep.subr.bf16.mxu0 0
    %356 = vmatpush1.bf16.msra.mxu0 %v333
    %357 = vmatprep.subr.bf16.mxu0 0
    %358 = vmatpush1.bf16.msra.mxu0 %v334
    %359 = vmatprep.subr.bf16.mxu0 0
    %360 = vmatpush1.bf16.msra.mxu0 0
    %361 = vmatprep.subr.bf16.mxu0 0
    %362 = vmatpush1.bf16.msra.mxu0 0
    %363 = vmatprep.subr.bf16.mxu0 0
    %364 = vmatpush1.bf16.msra.mxu0 0
    %365 = vmatprep.subr.bf16.mxu0 0
    %366 = vmatpush1.bf16.msra.mxu0 0
    %367 = vmatprep.subr.bf16.mxu0 0
    %368 = vmatpush1.bf16.msra.mxu0 0
    %369 = vmatprep.subr.bf16.mxu0 0
    %370 = vmatpush1.bf16.msra.mxu0 0
    %371 = vmatprep.subr.bf16.mxu0 0
    %372 = vmatpush1.bf16.msra.mxu0 0
    %373 = vmatprep.subr.bf16.mxu0 0
    %374 = vmatpush1.bf16.msra.mxu0 0
    %375 = vmatprep.mubr.bf16.mxu0 0
    %376 = vmatmul.mubr.bf16.gmra.mrb[0].mxu0 %v279
    %v377 = vpop.f32.mrb[0].mxu0
    %v378 = vadd.f32 %v245, %v377
    %v379 = vpop.f32.mrb[0].mxu0
    %v380 = vpop.f32.mrb[0].mxu0
    %v381 = vadd.f32 %v245, %v380
    %v382 = vpop.f32.mrb[0].mxu0
    %383 = vmatprep.mubr.bf16.mxu0 0
    %384 = vmatmul.mubr.bf16.gmra.mrb[0].mxu0 %v280
    %v385 = vpop.f32.mrb[0].mxu0
    %v386 = vadd.f32 %v245, %v385
    %v387 = vpop.f32.mrb[0].mxu0
    %v388 = vpop.f32.mrb[0].mxu0
    %v389 = vadd.f32 %v245, %v388
    %v390 = vpop.f32.mrb[0].mxu0
    %391 = vmatprep.mubr.bf16.mxu0 0
    %392 = vmatmul.mubr.bf16.gmra.mrb[0].mxu0 %v281
    %v393 = vpop.f32.mrb[0].mxu0
    %v394 = vadd.f32 %v245, %v393
    %v395 = vpop.f32.mrb[0].mxu0
    %v396 = vpop.f32.mrb[0].mxu0
    %v397 = vadd.f32 %v245, %v396
    %v398 = vpop.f32.mrb[0].mxu0
    %399 = vmatprep.mubr.bf16.mxu0 0
    %400 = vmatmul.mubr.bf16.gmra.mrb[0].mxu0 %v282
    %v401 = vpop.f32.mrb[0].mxu0
    %v402 = vadd.f32 %v245, %v401
    %v403 = vpop.f32.mrb[0].mxu0
    %v404 = vpop.f32.mrb[0].mxu0
    %v405 = vadd.f32 %v245, %v404
    %v406 = vpop.f32.mrb[0].mxu0
    %407 = vmatprep.mubr.bf16.mxu0 0
    %408 = vmatmul.mubr.bf16.gmra.mrb[0].mxu0 %v283
    %v409 = vpop.f32.mrb[0].mxu0
    %v410 = vadd.f32 %v245, %v409
    %v411 = vpop.f32.mrb[0].mxu0
    %v412 = vpop.f32.mrb[0].mxu0
    %v413 = vadd.f32 %v245, %v412
    %v414 = vpop.f32.mrb[0].mxu0
    %415 = vmatprep.mubr.bf16.mxu0 0
    %416 = vmatmul.mubr.bf16.gmra.mrb[0].mxu0 %v284
    %v417 = vpop.f32.mrb[0].mxu0
    %v418 = vadd.f32 %v245, %v417
    %v419 = vpop.f32.mrb[0].mxu0
    %v420 = vpop.f32.mrb[0].mxu0
    %v421 = vadd.f32 %v245, %v420
    %v422 = vpop.f32.mrb[0].mxu0
    %423 = vmatprep.mubr.bf16.mxu0 0
    %424 = vmatmul.mubr.bf16.gmra.mrb[0].mxu0 %v285
    %v425 = vpop.f32.mrb[0].mxu0
    %v426 = vadd.f32 %v245, %v425
    %v427 = vpop.f32.mrb[0].mxu0
    %v428 = vpop.f32.mrb[0].mxu0
    %v429 = vadd.f32 %v245, %v428
    %v430 = vpop.f32.mrb[0].mxu0
    %431 = vmatprep.mubr.bf16.mxu0 0
    %432 = vmatmul.mubr.bf16.gmra.mrb[0].mxu0 %v286
    %v433 = vpop.f32.mrb[0].mxu0
    %v434 = vadd.f32 %v245, %v433
    %v435 = vpop.f32.mrb[0].mxu0
    %v436 = vpop.f32.mrb[0].mxu0
    %v437 = vadd.f32 %v245, %v436
    %v438 = vpop.f32.mrb[0].mxu0
    %439 = vdwg.mxu0
    %v440 = vtanh.pop %v378
    %v441 = vtanh.pop %v381
    %v442 = vtanh.pop %v386
    %v443 = vtanh.pop %v389
    %v444 = vtanh.pop %v394
    %v445 = vtanh.pop %v397
    %v446 = vtanh.pop %v402
    %v447 = vtanh.pop %v405
    %v448 = vtanh.pop %v410
    %v449 = vtanh.pop %v413
    %v450 = vtanh.pop %v418
    %v451 = vtanh.pop %v421
    %v452 = vtanh.pop %v426
    %v453 = vtanh.pop %v429
    %v454 = vtanh.pop %v434
    %v455 = vtanh.pop %v437
    %v456 = vpack.c.bf16 %v441, %v440
    %v457 = vpack.c.bf16 %v443, %v442
    %v458 = vpack.c.bf16 %v445, %v444
    %v459 = vpack.c.bf16 %v447, %v446
    %v460 = vpack.c.bf16 %v449, %v448
    %v461 = vpack.c.bf16 %v451, %v450
    %v462 = vpack.c.bf16 %v453, %v452
    %v463 = vpack.c.bf16 %v455, %v454
    %v464 = vld [vmem:[#allocation2] sm:$0xff]
    %465 = vmatprep.subr.bf16.mxu0 0
    %466 = vmatpush1.bf16.xpose.msra.mxu0 %v456
    %467 = vmatprep.subr.bf16.mxu0 0
    %468 = vmatpush1.bf16.xpose.msra.mxu0 %v457
    %469 = vmatprep.subr.bf16.mxu0 0
    %470 = vmatpush1.bf16.xpose.msra.mxu0 %v458
    %471 = vmatprep.subr.bf16.mxu0 0
    %472 = vmatpush1.bf16.xpose.msra.mxu0 %v459
    %473 = vmatprep.subr.bf16.mxu0 0
    %474 = vmatpush1.bf16.xpose.msra.mxu0 %v460
    %475 = vmatprep.subr.bf16.mxu0 0
    %476 = vmatpush1.bf16.xpose.msra.mxu0 %v461
    %477 = vmatprep.subr.bf16.mxu0 0
    %478 = vmatpush1.bf16.xpose.msra.mxu0 %v462
    %479 = vmatprep.subr.bf16.mxu0 0
    %480 = vmatpush1.bf16.xpose.msra.mxu0 %v463
    %481 = vmatprep.subr.bf16.mxu0 0
    %482 = vmatpush1.bf16.xpose.msra.mxu0 0
    %483 = vmatprep.subr.bf16.mxu0 0
    %484 = vmatpush1.bf16.xpose.msra.mxu0 0
    %485 = vmatprep.subr.bf16.mxu0 0
    %486 = vmatpush1.bf16.xpose.msra.mxu0 0
    %487 = vmatprep.subr.bf16.mxu0 0
    %488 = vmatpush1.bf16.xpose.msra.mxu0 0
    %489 = vmatprep.subr.bf16.mxu0 0
    %490 = vmatpush1.bf16.xpose.msra.mxu0 0
    %491 = vmatprep.subr.bf16.mxu0 0
    %492 = vmatpush1.bf16.xpose.msra.mxu0 0
    %493 = vmatprep.subr.bf16.mxu0 0
    %494 = vmatpush1.bf16.xpose.msra.mxu0 0
    %495 = vmatprep.subr.bf16.mxu0 0
    %496 = vmatpush1.bf16.xpose.msra.mxu0 0
    %497 = vmatprep.mubr.bf16.mxu0 0
    %498 = vmatmul.mubr.bf16.gmra.mrb[0].mxu0 %v464
    %v499 = vpop.f32.mrb[0].mxu0
    %v500 = vadd.f32 0.0, %v499
    %v501 = vpop.f32.mrb[0].mxu0
    %v502 = vpop.f32.mrb[0].mxu0
    %v503 = vadd.f32 0.0, %v502
    %v504 = vpop.f32.mrb[0].mxu0
    %505 = vdwg.mxu0
    %506 = vst [vmem:[#allocation9] sm:$0xff] %v500
    %507 = vst [vmem:[#allocation9 + $0x8] sm:$0xff] %v503
    %v508 = vlaneseq
    %v509 = vand.u32 %v508, 127
    %v510 = vstv %s72
    %v511 = vadd.s32 %v509, %v510
    %vm512 = vcmp.lt.s32.totalorder %v511, 8
    %v513 = vsel %vm512, %v500, -1e+30
    %v514 = vsel %vm512, %v503, -1e+30
    %p515 = scmp.lt.s32.totalorder %s72, 2
    // Predicated region
    $region34: #{tpu_custom_call.1} parent=1 // pred_check
      %p516 = pneg %p515
    $region35: #{tpu_custom_call.1} parent=1 // pred_check_branch
      %518 = sbr.rel (%p516) target = $region37
    $region36: #{tpu_custom_call.1} parent=1 // pred_region
      %v519 = vlaneseq
      %v520 = vshrl.u32 %v519, 7
      %v521 = vadd.s32 %v520, 8
      %v522 = vld [vmem:[%s7] sm:$0xff]
      %v523 = vld [vmem:[%s7 + $0x8] sm:$0xff]
      %vm524 = vcmp.eq.s32.totalorder %v511, %v520
      %vm525 = vcmp.eq.s32.totalorder %v511, %v521
      %v526 = vsel %vm524, %v513, 0.0
      %v527 = vsel %vm525, %v514, 0.0
      %528 = vadd.xlane.f32.xlu0 %v526
      %v529 = vpop.xlane.xlu0 %528
      %530 = vadd.xlane.f32.xlu0 %v527
      %v531 = vpop.xlane.xlu0 %530
      %v532 = vadd.f32 %v522, %v529
      %v533 = vadd.f32 %v523, %v531
      %vm534 = vcmask 7168
      %535 = vst.msk [vmem:[%s7] sm:$0xff] %vm534, %v532
      %536 = vst.msk [vmem:[%s7 + $0x8] sm:$0xff] %vm534, %v533
    $region37: #{tpu_custom_call.1} parent=1 // pred_fallthru
      _
    %v537 = vld [vmem:[%s5] sm:$0xff]
    %v538 = vld [vmem:[%s5 + $0x8] sm:$0xff]
    %539 = vmax.xlane.f32.xlu0 %v513
    %v540 = vpop.xlane.xlu0 %539
    %541 = vmax.xlane.f32.xlu0 %v514
    %v542 = vpop.xlane.xlu0 %541
    %v543 = vmax.f32 %v537, %v540
    %v544 = vmax.f32 %v538, %v542
    %v545 = vld [vmem:[%s6] sm:$0xff]
    %v546 = vld [vmem:[%s6 + $0x8] sm:$0xff]
    %v547 = vsub.f32 %v537, %v543
    %v548 = vsub.f32 %v538, %v544
    %v549 = vmul.f32 %v547, 1.442695
    %v550 = vpow.pop %v549
    %v551 = vmul.f32 %v548, 1.442695
    %v552 = vpow.pop %v551
    %v553 = vmul.f32 %v545, %v550
    %v554 = vmul.f32 %v546, %v552
    %556 = vset.pattern.permute.xlu0 0
    %557 = vperm.xlu0 %556, %v543
    %v558 = vpop.permute.xlu0 %557
    %561 = vset.pattern.permute.xlu0 0
    %562 = vperm.xlu0 %561, %v544
    %v563 = vpop.permute.xlu0 %562
    %v565 = vsub.f32 %v513, %v558
    %v566 = vsub.f32 %v514, %v563
    %v567 = vmul.f32 %v565, 1.442695
    %v568 = vpow.pop %v567
    %v569 = vmul.f32 %v566, 1.442695
    %v570 = vpow.pop %v569
    %571 = vadd.xlane.f32.xlu0 %v568
    %v572 = vpop.xlane.xlu0 %571
    %573 = vadd.xlane.f32.xlu0 %v570
    %v574 = vpop.xlane.xlu0 %573
    %v575 = vadd.f32 %v553, %v572
    %v576 = vadd.f32 %v554, %v574
    %vm577 = vcmask 7168
    %578 = vst.msk [vmem:[%s6] sm:$0xff] %vm577, %v575
    %579 = vst.msk [vmem:[%s6 + $0x8] sm:$0xff] %vm577, %v576
    %580 = vst.msk [vmem:[%s5] sm:$0xff] %vm577, %v543
    %581 = vst.msk [vmem:[%s5 + $0x8] sm:$0xff] %vm577, %v544
    // Predicated region
    $region38: #{tpu_custom_call.1} parent=1 // pred_check
      _
    $region39: #{tpu_custom_call.1} parent=1 // pred_check_branch
      %583 = sbr.rel (0) target = $region41
    $region40: #{tpu_custom_call.1} parent=1 // pred_region
      %s584 = sadd.s32 0, 0
      %s586 = ssub.s32 256, 256
      %587 = vsyncadd [#allocation5], %s586
      %s588 = smul.addr %s584, 128
      %s589 = scalar_lea.hbm %s4, %s588
      %s590 = sshll.u32 [#allocation9], 4
      %s591 = int_to_ptr.vmem [resolvable:$true] %s590
      %596 = dma.vmem_to_hbm [thread:$0]  %s591, 256, %s589, [#allocation5], 128, 128, 8
    $region41: #{tpu_custom_call.1} parent=1 // pred_fallthru
      _
    // Predicated region
    $region42: #{tpu_custom_call.1} parent=1 // pred_check
      _
    $region43: #{tpu_custom_call.1} parent=1 // pred_check_branch
      %598 = sbr.rel (0) target = $region45
    $region44: #{tpu_custom_call.1} parent=1 // pred_region
      _
    $region45: #{tpu_custom_call.1} parent=1 // pred_fallthru
      _
    // Predicated region
    $region46: #{tpu_custom_call.1} parent=1 // pred_check
      _
    $region47: #{tpu_custom_call.1} parent=1 // pred_check_branch
      %600 = sbr.rel (0) target = $region49
    $region48: #{tpu_custom_call.1} parent=1 // pred_region
      _
    $region49: #{tpu_custom_call.1} parent=1 // pred_fallthru
      _
    // Predicated region
    $region50: #{tpu_custom_call.1} parent=1 // pred_check
      _
    $region51: #{tpu_custom_call.1} parent=1 // pred_check_branch
      %602 = sbr.rel (0) target = $region53
    $region52: #{tpu_custom_call.1} parent=1 // pred_region
      _
    $region53: #{tpu_custom_call.1} parent=1 // pred_fallthru
      _
    // Predicated region
    $region54: #{tpu_custom_call.1} parent=1 // pred_check
      _
    $region55: #{tpu_custom_call.1} parent=1 // pred_check_branch
      %604 = sbr.rel (0) target = $region57
    $region56: #{tpu_custom_call.1} parent=1 // pred_region
      %605 = dma.done [#allocation5], 256
    $region57: #{tpu_custom_call.1} parent=1 // pred_fallthru
      _
    // Predicated region
    $region58: #{tpu_custom_call.1} parent=1 // pred_check
      _
    $region59: #{tpu_custom_call.1} parent=1 // pred_check_branch
      %607 = sbr.rel (0) target = $region61
    $region60: #{tpu_custom_call.1} parent=1 // pred_region
      _
    $region61: #{tpu_custom_call.1} parent=1 // pred_fallthru
      _
    // Predicated region
    $region62: #{tpu_custom_call.1} parent=1 // pred_check
      _
    $region63: #{tpu_custom_call.1} parent=1 // pred_check_branch
      %609 = sbr.rel (0) target = $region65
    $region64: #{tpu_custom_call.1} parent=1 // pred_region
      _
    $region65: #{tpu_custom_call.1} parent=1 // pred_fallthru
      _
    // Predicated region
    $region66: #{tpu_custom_call.1} parent=1 // pred_check
      _
    $region67: #{tpu_custom_call.1} parent=1 // pred_check_branch
      %611 = sbr.rel (0) target = $region69
    $region68: #{tpu_custom_call.1} parent=1 // pred_region
      _
    $region69: #{tpu_custom_call.1} parent=1 // pred_fallthru
      _
    %612 = vsyncpa [#allocation4], 1
    %613 = vsyncpa [#allocation7], 1
    %614 = vsyncpa [#allocation5], 1

// kernel: tpu_custom_call.1
$region0: #{tpu_custom_call.1}
  #allocation0 [shape = 'u32[]', space=smem, size = 0x4, offset = 0x4, fixed_abs, tag = 'smem constant byte address 0x4 - core index']
  #allocation1 [shape = 'u32[144,128]{1,0:T(1,128)}', space=vmem, size = 0x12000, scoped, tag = 'internal scratch']
  #allocation2 [shape = 'bf16[16,128]{1,0:T(16,128)(2,1)}', space=vmem, size = 0x1000, scoped, tag = 'scratch operand']
  %s0 = inlined_call_operand.hbm [shape: bf16[16,128], index: 0, kind: input, shape index: {}]
  %s1 = inlined_call_operand.hbm [shape: bf16[128,128], index: 1, kind: input, shape index: {}]
  %s2 = inlined_call_operand.hbm [shape: bf16[128,128], index: 2, kind: input, shape index: {}]
  %s3 = inlined_call_operand.vmem [shape: f32[1,128], index: 3, kind: input, shape index: {}]
  %s4 = inlined_call_operand.hbm [shape: f32[16,128], index: 4, kind: output, shape index: {0}]
  %s5 = inlined_call_operand.vmem [shape: f32[1,16,1], index: 5, kind: output, shape index: {1}]
  %s6 = inlined_call_operand.vmem [shape: f32[1,16,1], index: 6, kind: output, shape index: {2}]
  %s7 = inlined_call_operand.vmem [shape: f32[1,16,1], index: 7, kind: output, shape index: {3}]
  %8 = xla_tuple %s4, %s5, %s6, %s7
  %s9 = sld [smem:[#allocation0]]
  $region70: #{tpu_custom_call.1} parent=0
    _
  %s11 = ssub.s32 1, %s9
  %s12 = scalar_select 0, %s11, %s9
  $region1: #{tpu_custom_call.1} parent=0
    #allocation3 [shape = 'u8[4096]{0}', space=vmem, size = 0x1000, scoped, tag = 'input window, operand 0, single buffered']
    #allocation4 [shape = 's32[1]{0}', space=sflag, size = 0x4, scoped, tag = 'scoped memory for tpu_custom_call.1']
    #allocation5 [shape = 's32[1]{0}', space=sflag, size = 0x4, scoped, tag = 'scoped memory for tpu_custom_call.1']
    #allocation6 [shape = 'u8[32768]{0}', space=vmem, size = 0x8000, scoped, tag = 'input window, operand 1, single buffered']
    #allocation7 [shape = 's32[1]{0}', space=sflag, size = 0x4, scoped, tag = 'scoped memory for tpu_custom_call.1']
    #allocation8 [shape = 'u8[32768]{0}', space=vmem, size = 0x8000, scoped, tag = 'input window, operand 2, single buffered']
    #allocation9 [shape = 'u8[8192]{0}', space=vmem, size = 0x2000, scoped, tag = 'output window, operand 0, single buffered']
    %13 = vsyncpa [#allocation4], 0
    %14 = vsyncpa [#allocation7], 0
    %15 = vsyncpa [#allocation5], 0
    // Predicated region
    $region2: #{tpu_custom_call.1} parent=1 // pred_check
      _
    $region3: #{tpu_custom_call.1} parent=1 // pred_check_branch
      %17 = sbr.rel (0) target = $region5
    $region4: #{tpu_custom_call.1} parent=1 // pred_region
      %s19 = ssub.s32 128, 128
      %20 = vsyncadd [#allocation4], %s19
      %s21 = sshll.u32 [#allocation3], 4
      %s22 = int_to_ptr.vmem [resolvable:$true] %s21
      %27 = dma.hbm_to_vmem [thread:$0]  %s0, 128, %s22, [#allocation4], 64, 64, 4
    $region5: #{tpu_custom_call.1} parent=1 // pred_fallthru
      _
    // Predicated region
    $region6: #{tpu_custom_call.1} parent=1 // pred_check
      _
    $region7: #{tpu_custom_call.1} parent=1 // pred_check_branch
      %29 = sbr.rel (0) target = $region9
    $region8: #{tpu_custom_call.1} parent=1 // pred_region
      %s30 = sadd.s32 0, 0
      %s31 = smul.u32 16, %s30
      %s33 = ssub.s32 1024, 1024
      %34 = vsyncadd [#allocation7], %s33
      %s35 = smul.addr %s31, 64
      %s36 = scalar_lea.hbm %s1, %s35
      %s37 = sshll.u32 [#allocation6], 4
      %s38 = int_to_ptr.vmem [resolvable:$true] %s37
      %43 = dma.hbm_to_vmem [thread:$0]  %s36, 1024, %s38, [#allocation7], 64, 64, 4
    $region9: #{tpu_custom_call.1} parent=1 // pred_fallthru
      _
    // Predicated region
    $region10: #{tpu_custom_call.1} parent=1 // pred_check
      _
    $region11: #{tpu_custom_call.1} parent=1 // pred_check_branch
      %45 = sbr.rel (0) target = $region13
    $region12: #{tpu_custom_call.1} parent=1 // pred_region
      %s47 = ssub.s32 1024, 1024
      %48 = vsyncadd [#allocation7], %s47
      %s49 = sshll.u32 [#allocation8], 4
      %s50 = int_to_ptr.vmem [resolvable:$true] %s49
      %55 = dma.hbm_to_vmem [thread:$0]  %s2, 1024, %s50, [#allocation7], 64, 64, 4
    $region13: #{tpu_custom_call.1} parent=1 // pred_fallthru
      _
    // Predicated region
    $region14: #{tpu_custom_call.1} parent=1 // pred_check
      _
    $region15: #{tpu_custom_call.1} parent=1 // pred_check_branch
      %57 = sbr.rel (0) target = $region17
    $region16: #{tpu_custom_call.1} parent=1 // pred_region
      _
    $region17: #{tpu_custom_call.1} parent=1 // pred_fallthru
      _
    // Predicated region
    $region18: #{tpu_custom_call.1} parent=1 // pred_check
      _
    $region19: #{tpu_custom_call.1} parent=1 // pred_check_branch
      %59 = sbr.rel (0) target = $region21
    $region20: #{tpu_custom_call.1} parent=1 // pred_region
      %60 = dma.done [#allocation4], 128
    $region21: #{tpu_custom_call.1} parent=1 // pred_fallthru
      _
    // Predicated region
    $region22: #{tpu_custom_call.1} parent=1 // pred_check
      _
    $region23: #{tpu_custom_call.1} parent=1 // pred_check_branch
      %62 = sbr.rel (0) target = $region25
    $region24: #{tpu_custom_call.1} parent=1 // pred_region
      %63 = dma.done [#allocation7], 1024
    $region25: #{tpu_custom_call.1} parent=1 // pred_fallthru
      _
    // Predicated region
    $region26: #{tpu_custom_call.1} parent=1 // pred_check
      _
    $region27: #{tpu_custom_call.1} parent=1 // pred_check_branch
      %65 = sbr.rel (0) target = $region29
    $region28: #{tpu_custom_call.1} parent=1 // pred_region
      %66 = dma.done [#allocation7], 1024
    $region29: #{tpu_custom_call.1} parent=1 // pred_fallthru
      _
    %s67 = sadd.s32 0, 0
    %s68 = smul.u32 16, %s67
    %s69 = sadd.s32 0, 0
    %s71 = sadd.s32 0, 0
    %s72 = smul.u32 %s71, 128
    %p73 = scmp.eq.s32.totalorder 0, 0
    // Predicated region
    $region30: #{tpu_custom_call.1} parent=1 // pred_check
      %p74 = pneg %p73
    $region31: #{tpu_custom_call.1} parent=1 // pred_check_branch
      %76 = sbr.rel (%p74) target = $region33
    $region32: #{tpu_custom_call.1} parent=1 // pred_region
      %v77 = vld [vmem:[#allocation3] sm:$0xf]
      %v78 = vld [vmem:[#allocation3 + $0x4] sm:$0xf]
      %v79 = vld [vmem:[#allocation8] sm:$0xf]
      %v80 = vld [vmem:[#allocation8 + $0x4] sm:$0xf]
      %v81 = vld [vmem:[#allocation8 + $0x8] sm:$0xf]
      %v82 = vld [vmem:[#allocation8 + $0xc] sm:$0xf]
      %v83 = vld [vmem:[#allocation8 + $0x10] sm:$0xf]
      %v84 = vld [vmem:[#allocation8 + $0x14] sm:$0xf]
      %v85 = vld [vmem:[#allocation8 + $0x18] sm:$0xf]
      %v86 = vld [vmem:[#allocation8 + $0x1c] sm:$0xf]
      %v87 = vld [vmem:[#allocation8 + $0x20] sm:$0xf]
      %v88 = vld [vmem:[#allocation8 + $0x24] sm:$0xf]
      %v89 = vld [vmem:[#allocation8 + $0x28] sm:$0xf]
      %v90 = vld [vmem:[#allocation8 + $0x2c] sm:$0xf]
      %v91 = vld [vmem:[#allocation8 + $0x30] sm:$0xf]
      %v92 = vld [vmem:[#allocation8 + $0x34] sm:$0xf]
      %v93 = vld [vmem:[#allocation8 + $0x38] sm:$0xf]
      %v94 = vld [vmem:[#allocation8 + $0x3c] sm:$0xf]
      %v95 = vld [vmem:[%s3] sm:$0x1]
      %v97 = vlaneseq
      %v98 = vshrl.u32 %v97, 7
      %v99 = vsub.s32 0, %v98
      %v100 = vrot.slane %v95, %v99
      %v104 = vunpack.c.l.b16 %v77
      %v105 = vunpack.c.l.b16 %v78
      %v106 = vpack.c.b16 %v105, %v104
      %v124 = vunpack.c.l.b16 %v79
      %v125 = vunpack.c.l.b16 %v80
      %v126 = vunpack.c.l.b16 %v81
      %v127 = vunpack.c.l.b16 %v82
      %v128 = vunpack.c.l.b16 %v83
      %v129 = vunpack.c.l.b16 %v84
      %v130 = vunpack.c.l.b16 %v85
      %v131 = vunpack.c.l.b16 %v86
      %v132 = vunpack.c.l.b16 %v87
      %v133 = vunpack.c.l.b16 %v88
      %v134 = vunpack.c.l.b16 %v89
      %v135 = vunpack.c.l.b16 %v90
      %v136 = vunpack.c.l.b16 %v91
      %v137 = vunpack.c.l.b16 %v92
      %v138 = vunpack.c.l.b16 %v93
      %v139 = vunpack.c.l.b16 %v94
      %v140 = vpack.c.b16 %v125, %v124
      %v141 = vpack.c.b16 %v127, %v126
      %v142 = vpack.c.b16 %v129, %v128
      %v143 = vpack.c.b16 %v131, %v130
      %v144 = vpack.c.b16 %v133, %v132
      %v145 = vpack.c.b16 %v135, %v134
      %v146 = vpack.c.b16 %v137, %v136
      %v147 = vpack.c.b16 %v139, %v138
      %156 = vmatprep.subr.bf16.mxu0 0
      %157 = vmatpush1.bf16.msra.mxu0 %v140
      %158 = vmatprep.subr.bf16.mxu0 0
      %159 = vmatpush1.bf16.msra.mxu0 %v141
      %160 = vmatprep.subr.bf16.mxu0 0
      %161 = vmatpush1.bf16.msra.mxu0 %v142
      %162 = vmatprep.subr.bf16.mxu0 0
      %163 = vmatpush1.bf16.msra.mxu0 %v143
      %164 = vmatprep.subr.bf16.mxu0 0
      %165 = vmatpush1.bf16.msra.mxu0 %v144
      %166 = vmatprep.subr.bf16.mxu0 0
      %167 = vmatpush1.bf16.msra.mxu0 %v145
      %168 = vmatprep.subr.bf16.mxu0 0
      %169 = vmatpush1.bf16.msra.mxu0 %v146
      %170 = vmatprep.subr.bf16.mxu0 0
      %171 = vmatpush1.bf16.msra.mxu0 %v147
      %172 = vmatprep.subr.bf16.mxu0 0
      %173 = vmatpush1.bf16.msra.mxu0 0
      %174 = vmatprep.subr.bf16.mxu0 0
      %175 = vmatpush1.bf16.msra.mxu0 0
      %176 = vmatprep.subr.bf16.mxu0 0
      %177 = vmatpush1.bf16.msra.mxu0 0
      %178 = vmatprep.subr.bf16.mxu0 0
      %179 = vmatpush1.bf16.msra.mxu0 0
      %180 = vmatprep.subr.bf16.mxu0 0
      %181 = vmatpush1.bf16.msra.mxu0 0
      %182 = vmatprep.subr.bf16.mxu0 0
      %183 = vmatpush1.bf16.msra.mxu0 0
      %184 = vmatprep.subr.bf16.mxu0 0
      %185 = vmatpush1.bf16.msra.mxu0 0
      %186 = vmatprep.subr.bf16.mxu0 0
      %187 = vmatpush1.bf16.msra.mxu0 0
      %188 = vmatprep.mubr.bf16.mxu0 0
      %189 = vmatmul.mubr.bf16.gmra.mrb[0].mxu0 %v106
      %v190 = vpop.f32.mrb[0].mxu0
      %v191 = vadd.f32 %v100, %v190
      %v192 = vpop.f32.mrb[0].mxu0
      %v193 = vpop.f32.mrb[0].mxu0
      %v194 = vadd.f32 %v100, %v193
      %v195 = vpop.f32.mrb[0].mxu0
      %196 = vdwg.mxu0
      %v197 = vtanh.pop %v191
      %v198 = vtanh.pop %v194
      %v199 = vpack.c.bf16 %v198, %v197
      %200 = vst [vmem:[#allocation2] sm:$0xff] %v199
      %vm201 = vcmask 7168
      %202 = vst.msk [vmem:[%s5] sm:$0xff] %vm201, -1e+30
      %203 = vst.msk [vmem:[%s5 + $0x8] sm:$0xff] %vm201, -1e+30
      %204 = vst.msk [vmem:[%s6] sm:$0xff] %vm201, 0.0
      %205 = vst.msk [vmem:[%s6 + $0x8] sm:$0xff] %vm201, 0.0
      %206 = vst.msk [vmem:[%s7] sm:$0xff] %vm201, 0.0
      %207 = vst.msk [vmem:[%s7 + $0x8] sm:$0xff] %vm201, 0.0
    $region33: #{tpu_custom_call.1} parent=1 // pred_fallthru
      _
    %v208 = vld [vmem:[#allocation6] sm:$0xf]
    %v209 = vld [vmem:[#allocation6 + $0x4] sm:$0xf]
    %v210 = vld [vmem:[#allocation6 + $0x8] sm:$0xf]
    %v211 = vld [vmem:[#allocation6 + $0xc] sm:$0xf]
    %v212 = vld [vmem:[#allocation6 + $0x10] sm:$0xf]
    %v213 = vld [vmem:[#allocation6 + $0x14] sm:$0xf]
    %v214 = vld [vmem:[#allocation6 + $0x18] sm:$0xf]
    %v215 = vld [vmem:[#allocation6 + $0x1c] sm:$0xf]
    %v216 = vld [vmem:[#allocation6 + $0x20] sm:$0xf]
    %v217 = vld [vmem:[#allocation6 + $0x24] sm:$0xf]
    %v218 = vld [vmem:[#allocation6 + $0x28] sm:$0xf]
    %v219 = vld [vmem:[#allocation6 + $0x2c] sm:$0xf]
    %v220 = vld [vmem:[#allocation6 + $0x30] sm:$0xf]
    %v221 = vld [vmem:[#allocation6 + $0x34] sm:$0xf]
    %v222 = vld [vmem:[#allocation6 + $0x38] sm:$0xf]
    %v223 = vld [vmem:[#allocation6 + $0x3c] sm:$0xf]
    %v224 = vld [vmem:[#allocation8] sm:$0xf]
    %v225 = vld [vmem:[#allocation8 + $0x4] sm:$0xf]
    %v226 = vld [vmem:[#allocation8 + $0x8] sm:$0xf]
    %v227 = vld [vmem:[#allocation8 + $0xc] sm:$0xf]
    %v228 = vld [vmem:[#allocation8 + $0x10] sm:$0xf]
    %v229 = vld [vmem:[#allocation8 + $0x14] sm:$0xf]
    %v230 = vld [vmem:[#allocation8 + $0x18] sm:$0xf]
    %v231 = vld [vmem:[#allocation8 + $0x1c] sm:$0xf]
    %v232 = vld [vmem:[#allocation8 + $0x20] sm:$0xf]
    %v233 = vld [vmem:[#allocation8 + $0x24] sm:$0xf]
    %v234 = vld [vmem:[#allocation8 + $0x28] sm:$0xf]
    %v235 = vld [vmem:[#allocation8 + $0x2c] sm:$0xf]
    %v236 = vld [vmem:[#allocation8 + $0x30] sm:$0xf]
    %v237 = vld [vmem:[#allocation8 + $0x34] sm:$0xf]
    %v238 = vld [vmem:[#allocation8 + $0x38] sm:$0xf]
    %v239 = vld [vmem:[#allocation8 + $0x3c] sm:$0xf]
    %v240 = vld [vmem:[%s3] sm:$0x1]
    %v242 = vlaneseq
    %v243 = vshrl.u32 %v242, 7
    %v244 = vsub.s32 0, %v243
    %v245 = vrot.slane %v240, %v244
    %v263 = vunpack.c.l.b16 %v208
    %v264 = vunpack.c.l.b16 %v209
    %v265 = vunpack.c.l.b16 %v210
    %v266 = vunpack.c.l.b16 %v211
    %v267 = vunpack.c.l.b16 %v212
    %v268 = vunpack.c.l.b16 %v213
    %v269 = vunpack.c.l.b16 %v214
    %v270 = vunpack.c.l.b16 %v215
    %v271 = vunpack.c.l.b16 %v216
    %v272 = vunpack.c.l.b16 %v217
    %v273 = vunpack.c.l.b16 %v218
    %v274 = vunpack.c.l.b16 %v219
    %v275 = vunpack.c.l.b16 %v220
    %v276 = vunpack.c.l.b16 %v221
    %v277 = vunpack.c.l.b16 %v222
    %v278 = vunpack.c.l.b16 %v223
    %v279 = vpack.c.b16 %v264, %v263
    %v280 = vpack.c.b16 %v266, %v265
    %v281 = vpack.c.b16 %v268, %v267
    %v282 = vpack.c.b16 %v270, %v269
    %v283 = vpack.c.b16 %v272, %v271
    %v284 = vpack.c.b16 %v274, %v273
    %v285 = vpack.c.b16 %v276, %v275
    %v286 = vpack.c.b16 %v278, %v277
    %v311 = vunpack.c.l.b16 %v224
    %v312 = vunpack.c.l.b16 %v225
    %v313 = vunpack.c.l.b16 %v226
    %v314 = vunpack.c.l.b16 %v227
    %v315 = vunpack.c.l.b16 %v228
    %v316 = vunpack.c.l.b16 %v229
    %v317 = vunpack.c.l.b16 %v230
    %v318 = vunpack.c.l.b16 %v231
    %v319 = vunpack.c.l.b16 %v232
    %v320 = vunpack.c.l.b16 %v233
    %v321 = vunpack.c.l.b16 %v234
    %v322 = vunpack.c.l.b16 %v235
    %v323 = vunpack.c.l.b16 %v236
    %v324 = vunpack.c.l.b16 %v237
    %v325 = vunpack.c.l.b16 %v238
    %v326 = vunpack.c.l.b16 %v239
    %v327 = vpack.c.b16 %v312, %v311
    %v328 = vpack.c.b16 %v314, %v313
    %v329 = vpack.c.b16 %v316, %v315
    %v330 = vpack.c.b16 %v318, %v317
    %v331 = vpack.c.b16 %v320, %v319
    %v332 = vpack.c.b16 %v322, %v321
    %v333 = vpack.c.b16 %v324, %v323
    %v334 = vpack.c.b16 %v326, %v325
    %343 = vmatprep.subr.bf16.mxu0 0
    %344 = vmatpush1.bf16.msra.mxu0 %v327
    %345 = vmatprep.subr.bf16.mxu0 0
    %346 = vmatpush1.bf16.msra.mxu0 %v328
    %347 = vmatprep.subr.bf16.mxu0 0
    %348 = vmatpush1.bf16.msra.mxu0 %v329
    %349 = vmatprep.subr.bf16.mxu0 0
    %350 = vmatpush1.bf16.msra.mxu0 %v330
    %351 = vmatprep.subr.bf16.mxu0 0
    %352 = vmatpush1.bf16.msra.mxu0 %v331
    %353 = vmatprep.subr.bf16.mxu0 0
    %354 = vmatpush1.bf16.msra.mxu0 %v332
    %355 = vmatprep.subr.bf16.mxu0 0
    %356 = vmatpush1.bf16.msra.mxu0 %v333
    %357 = vmatprep.subr.bf16.mxu0 0
    %358 = vmatpush1.bf16.msra.mxu0 %v334
    %359 = vmatprep.subr.bf16.mxu0 0
    %360 = vmatpush1.bf16.msra.mxu0 0
    %361 = vmatprep.subr.bf16.mxu0 0
    %362 = vmatpush1.bf16.msra.mxu0 0
    %363 = vmatprep.subr.bf16.mxu0 0
    %364 = vmatpush1.bf16.msra.mxu0 0
    %365 = vmatprep.subr.bf16.mxu0 0
    %366 = vmatpush1.bf16.msra.mxu0 0
    %367 = vmatprep.subr.bf16.mxu0 0
    %368 = vmatpush1.bf16.msra.mxu0 0
    %369 = vmatprep.subr.bf16.mxu0 0
    %370 = vmatpush1.bf16.msra.mxu0 0
    %371 = vmatprep.subr.bf16.mxu0 0
    %372 = vmatpush1.bf16.msra.mxu0 0
    %373 = vmatprep.subr.bf16.mxu0 0
    %374 = vmatpush1.bf16.msra.mxu0 0
    %375 = vmatprep.mubr.bf16.mxu0 0
    %376 = vmatmul.mubr.bf16.gmra.mrb[0].mxu0 %v279
    %v377 = vpop.f32.mrb[0].mxu0
    %v378 = vadd.f32 %v245, %v377
    %v379 = vpop.f32.mrb[0].mxu0
    %v380 = vpop.f32.mrb[0].mxu0
    %v381 = vadd.f32 %v245, %v380
    %v382 = vpop.f32.mrb[0].mxu0
    %383 = vmatprep.mubr.bf16.mxu0 0
    %384 = vmatmul.mubr.bf16.gmra.mrb[0].mxu0 %v280
    %v385 = vpop.f32.mrb[0].mxu0
    %v386 = vadd.f32 %v245, %v385
    %v387 = vpop.f32.mrb[0].mxu0
    %v388 = vpop.f32.mrb[0].mxu0
    %v389 = vadd.f32 %v245, %v388
    %v390 = vpop.f32.mrb[0].mxu0
    %391 = vmatprep.mubr.bf16.mxu0 0
    %392 = vmatmul.mubr.bf16.gmra.mrb[0].mxu0 %v281
    %v393 = vpop.f32.mrb[0].mxu0
    %v394 = vadd.f32 %v245, %v393
    %v395 = vpop.f32.mrb[0].mxu0
    %v396 = vpop.f32.mrb[0].mxu0
    %v397 = vadd.f32 %v245, %v396
    %v398 = vpop.f32.mrb[0].mxu0
    %399 = vmatprep.mubr.bf16.mxu0 0
    %400 = vmatmul.mubr.bf16.gmra.mrb[0].mxu0 %v282
    %v401 = vpop.f32.mrb[0].mxu0
    %v402 = vadd.f32 %v245, %v401
    %v403 = vpop.f32.mrb[0].mxu0
    %v404 = vpop.f32.mrb[0].mxu0
    %v405 = vadd.f32 %v245, %v404
    %v406 = vpop.f32.mrb[0].mxu0
    %407 = vmatprep.mubr.bf16.mxu0 0
    %408 = vmatmul.mubr.bf16.gmra.mrb[0].mxu0 %v283
    %v409 = vpop.f32.mrb[0].mxu0
    %v410 = vadd.f32 %v245, %v409
    %v411 = vpop.f32.mrb[0].mxu0
    %v412 = vpop.f32.mrb[0].mxu0
    %v413 = vadd.f32 %v245, %v412
    %v414 = vpop.f32.mrb[0].mxu0
    %415 = vmatprep.mubr.bf16.mxu0 0
    %416 = vmatmul.mubr.bf16.gmra.mrb[0].mxu0 %v284
    %v417 = vpop.f32.mrb[0].mxu0
    %v418 = vadd.f32 %v245, %v417
    %v419 = vpop.f32.mrb[0].mxu0
    %v420 = vpop.f32.mrb[0].mxu0
    %v421 = vadd.f32 %v245, %v420
    %v422 = vpop.f32.mrb[0].mxu0
    %423 = vmatprep.mubr.bf16.mxu0 0
    %424 = vmatmul.mubr.bf16.gmra.mrb[0].mxu0 %v285
    %v425 = vpop.f32.mrb[0].mxu0
    %v426 = vadd.f32 %v245, %v425
    %v427 = vpop.f32.mrb[0].mxu0
    %v428 = vpop.f32.mrb[0].mxu0
    %v429 = vadd.f32 %v245, %v428
    %v430 = vpop.f32.mrb[0].mxu0
    %431 = vmatprep.mubr.bf16.mxu0 0
    %432 = vmatmul.mubr.bf16.gmra.mrb[0].mxu0 %v286
    %v433 = vpop.f32.mrb[0].mxu0
    %v434 = vadd.f32 %v245, %v433
    %v435 = vpop.f32.mrb[0].mxu0
    %v436 = vpop.f32.mrb[0].mxu0
    %v437 = vadd.f32 %v245, %v436
    %v438 = vpop.f32.mrb[0].mxu0
    %439 = vdwg.mxu0
    %v440 = vtanh.pop %v378
    %v441 = vtanh.pop %v381
    %v442 = vtanh.pop %v386
    %v443 = vtanh.pop %v389
    %v444 = vtanh.pop %v394
    %v445 = vtanh.pop %v397
    %v446 = vtanh.pop %v402
    %v447 = vtanh.pop %v405
    %v448 = vtanh.pop %v410
    %v449 = vtanh.pop %v413
    %v450 = vtanh.pop %v418
    %v451 = vtanh.pop %v421
    %v452 = vtanh.pop %v426
    %v453 = vtanh.pop %v429
    %v454 = vtanh.pop %v434
    %v455 = vtanh.pop %v437
    %v456 = vpack.c.bf16 %v441, %v440
    %v457 = vpack.c.bf16 %v443, %v442
    %v458 = vpack.c.bf16 %v445, %v444
    %v459 = vpack.c.bf16 %v447, %v446
    %v460 = vpack.c.bf16 %v449, %v448
    %v461 = vpack.c.bf16 %v451, %v450
    %v462 = vpack.c.bf16 %v453, %v452
    %v463 = vpack.c.bf16 %v455, %v454
    %v464 = vld [vmem:[#allocation2] sm:$0xff]
    %465 = vmatprep.subr.bf16.mxu0 0
    %466 = vmatpush1.bf16.xpose.msra.mxu0 %v456
    %467 = vmatprep.subr.bf16.mxu0 0
    %468 = vmatpush1.bf16.xpose.msra.mxu0 %v457
    %469 = vmatprep.subr.bf16.mxu0 0
    %470 = vmatpush1.bf16.xpose.msra.mxu0 %v458
    %471 = vmatprep.subr.bf16.mxu0 0
    %472 = vmatpush1.bf16.xpose.msra.mxu0 %v459
    %473 = vmatprep.subr.bf16.mxu0 0
    %474 = vmatpush1.bf16.xpose.msra.mxu0 %v460
    %475 = vmatprep.subr.bf16.mxu0 0
    %476 = vmatpush1.bf16.xpose.msra.mxu0 %v461
    %477 = vmatprep.subr.bf16.mxu0 0
    %478 = vmatpush1.bf16.xpose.msra.mxu0 %v462
    %479 = vmatprep.subr.bf16.mxu0 0
    %480 = vmatpush1.bf16.xpose.msra.mxu0 %v463
    %481 = vmatprep.subr.bf16.mxu0 0
    %482 = vmatpush1.bf16.xpose.msra.mxu0 0
    %483 = vmatprep.subr.bf16.mxu0 0
    %484 = vmatpush1.bf16.xpose.msra.mxu0 0
    %485 = vmatprep.subr.bf16.mxu0 0
    %486 = vmatpush1.bf16.xpose.msra.mxu0 0
    %487 = vmatprep.subr.bf16.mxu0 0
    %488 = vmatpush1.bf16.xpose.msra.mxu0 0
    %489 = vmatprep.subr.bf16.mxu0 0
    %490 = vmatpush1.bf16.xpose.msra.mxu0 0
    %491 = vmatprep.subr.bf16.mxu0 0
    %492 = vmatpush1.bf16.xpose.msra.mxu0 0
    %493 = vmatprep.subr.bf16.mxu0 0
    %494 = vmatpush1.bf16.xpose.msra.mxu0 0
    %495 = vmatprep.subr.bf16.mxu0 0
    %496 = vmatpush1.bf16.xpose.msra.mxu0 0
    %497 = vmatprep.mubr.bf16.mxu0 0
    %498 = vmatmul.mubr.bf16.gmra.mrb[0].mxu0 %v464
    %v499 = vpop.f32.mrb[0].mxu0
    %v500 = vadd.f32 0.0, %v499
    %v501 = vpop.f32.mrb[0].mxu0
    %v502 = vpop.f32.mrb[0].mxu0
    %v503 = vadd.f32 0.0, %v502
    %v504 = vpop.f32.mrb[0].mxu0
    %505 = vdwg.mxu0
    %506 = vst [vmem:[#allocation9] sm:$0xff] %v500
    %507 = vst [vmem:[#allocation9 + $0x8] sm:$0xff] %v503
    %v508 = vlaneseq
    %v509 = vand.u32 %v508, 127
    %v510 = vstv %s72
    %v511 = vadd.s32 %v509, %v510
    %vm512 = vcmp.lt.s32.totalorder %v511, 8
    %v513 = vsel %vm512, %v500, -1e+30
    %v514 = vsel %vm512, %v503, -1e+30
    %p515 = scmp.lt.s32.totalorder %s72, 2
    // Predicated region
    $region34: #{tpu_custom_call.1} parent=1 // pred_check
      %p516 = pneg %p515
    $region35: #{tpu_custom_call.1} parent=1 // pred_check_branch
      %518 = sbr.rel (%p516) target = $region37
    $region36: #{tpu_custom_call.1} parent=1 // pred_region
      %v519 = vlaneseq
      %v520 = vshrl.u32 %v519, 7
      %v521 = vadd.s32 %v520, 8
      %v522 = vld [vmem:[%s7] sm:$0xff]
      %v523 = vld [vmem:[%s7 + $0x8] sm:$0xff]
      %vm524 = vcmp.eq.s32.totalorder %v511, %v520
      %vm525 = vcmp.eq.s32.totalorder %v511, %v521
      %v526 = vsel %vm524, %v513, 0.0
      %v527 = vsel %vm525, %v514, 0.0
      %528 = vadd.xlane.f32.xlu0 %v526
      %v529 = vpop.xlane.xlu0 %528
      %530 = vadd.xlane.f32.xlu0 %v527
      %v531 = vpop.xlane.xlu0 %530
      %v532 = vadd.f32 %v522, %v529
      %v533 = vadd.f32 %v523, %v531
      %vm534 = vcmask 7168
      %535 = vst.msk [vmem:[%s7] sm:$0xff] %vm534, %v532
      %536 = vst.msk [vmem:[%s7 + $0x8] sm:$0xff] %vm534, %v533
    $region37: #{tpu_custom_call.1} parent=1 // pred_fallthru
      _
    %v537 = vld [vmem:[%s5] sm:$0xff]
    %v538 = vld [vmem:[%s5 + $0x8] sm:$0xff]
    %539 = vmax.xlane.f32.xlu0 %v513
    %v540 = vpop.xlane.xlu0 %539
    %541 = vmax.xlane.f32.xlu0 %v514
    %v542 = vpop.xlane.xlu0 %541
    %v543 = vmax.f32 %v537, %v540
    %v544 = vmax.f32 %v538, %v542
    %v545 = vld [vmem:[%s6] sm:$0xff]
    %v546 = vld [vmem:[%s6 + $0x8] sm:$0xff]
    %v547 = vsub.f32 %v537, %v543
    %v548 = vsub.f32 %v538, %v544
    %v549 = vmul.f32 %v547, 1.442695
    %v550 = vpow.pop %v549
    %v551 = vmul.f32 %v548, 1.442695
    %v552 = vpow.pop %v551
    %v553 = vmul.f32 %v545, %v550
    %v554 = vmul.f32 %v546, %v552
    %556 = vset.pattern.permute.xlu0 0
    %557 = vperm.xlu0 %556, %v543
    %v558 = vpop.permute.xlu0 %557
    %561 = vset.pattern.permute.xlu0 0
    %562 = vperm.xlu0 %561, %v544
    %v563 = vpop.permute.xlu0 %562
    %v565 = vsub.f32 %v513, %v558
    %v566 = vsub.f32 %v514, %v563
    %v567 = vmul.f32 %v565, 1.442695
    %v568 = vpow.pop %v567
    %v569 = vmul.f32 %v566, 1.442695
    %v570 = vpow.pop %v569
    %571 = vadd.xlane.f32.xlu0 %v568
    %v572 = vpop.xlane.xlu0 %571
    %573 = vadd.xlane.f32.xlu0 %v570
    %v574 = vpop.xlane.xlu0 %573
    %v575 = vadd.f32 %v553, %v572
    %v576 = vadd.f32 %v554, %v574
    %vm577 = vcmask 7168
    %578 = vst.msk [vmem:[%s6] sm:$0xff] %vm577, %v575
    %579 = vst.msk [vmem:[%s6 + $0x8] sm:$0xff] %vm577, %v576
    %580 = vst.msk [vmem:[%s5] sm:$0xff] %vm577, %v543
    %581 = vst.msk [vmem:[%s5 + $0x8] sm:$0xff] %vm577, %v544
    // Predicated region
    $region38: #{tpu_custom_call.1} parent=1 // pred_check
      _
    $region39: #{tpu_custom_call.1} parent=1 // pred_check_branch
      %583 = sbr.rel (0) target = $region41
    $region40: #{tpu_custom_call.1} parent=1 // pred_region
      %s584 = sadd.s32 0, 0
      %s586 = ssub.s32 256, 256
      %587 = vsyncadd [#allocation5], %s586
      %s588 = smul.addr %s584, 128
      %s589 = scalar_lea.hbm %s4, %s588
      %s590 = sshll.u32 [#allocation9], 4
      %s591 = int_to_ptr.vmem [resolvable:$true] %s590
      %596 = dma.vmem_to_hbm [thread:$0]  %s591, 256, %s589, [#allocation5], 128, 128, 8
    $region41: #{tpu_custom_call.1} parent=1 // pred_fallthru
      _
    // Predicated region
    $region42: #{tpu_custom_call.1} parent=1 // pred_check
      _
    $region43: #{tpu_custom_call.1} parent=1 // pred_check_branch
      %598 = sbr.rel (0) target = $region45
    $region44: #{tpu_custom_call.1} parent=1 // pred_region
      _
    $region45: #{tpu_custom_call.1} parent=1 // pred_fallthru
      _
    // Predicated region
    $region46: #{tpu_custom_call.1} parent=1 // pred_check
      _
    $region47: #{tpu_custom_call.1} parent=1 // pred_check_branch
      %600 = sbr.rel (0) target = $region49
    $region48: #{tpu_custom_call.1} parent=1 // pred_region
      _
    $region49: #{tpu_custom_call.1} parent=1 // pred_fallthru
      _
    // Predicated region
    $region50: #{tpu_custom_call.1} parent=1 // pred_check
      _
    $region51: #{tpu_custom_call.1} parent=1 // pred_check_branch
      %602 = sbr.rel (0) target = $region53
    $region52: #{tpu_custom_call.1} parent=1 // pred_region
      _
    $region53: #{tpu_custom_call.1} parent=1 // pred_fallthru
      _
    // Predicated region
    $region54: #{tpu_custom_call.1} parent=1 // pred_check
      _
    $region55: #{tpu_custom_call.1} parent=1 // pred_check_branch
      %604 = sbr.rel (0) target = $region57
    $region56: #{tpu_custom_call.1} parent=1 // pred_region
      %605 = dma.done [#allocation5], 256
    $region57: #{tpu_custom_call.1} parent=1 // pred_fallthru
      _
    // Predicated region
    $region58: #{tpu_custom_call.1} parent=1 // pred_check
      _
    $region59: #{tpu_custom_call.1} parent=1 // pred_check_branch
      %607 = sbr.rel (0) target = $region61
    $region60: #{tpu_custom_call.1} parent=1 // pred_region
      _
    $region61: #{tpu_custom_call.1} parent=1 // pred_fallthru
      _
    // Predicated region
    $region62: #{tpu_custom_call.1} parent=1 // pred_check
      _
    $region63: #{tpu_custom_call.1} parent=1 // pred_check_branch
      %609 = sbr.rel (0) target = $region65
    $region64: #{tpu_custom_call.1} parent=1 // pred_region
      _
    $region65: #{tpu_custom_call.1} parent=1 // pred_fallthru
      _
    // Predicated region
    $region66: #{tpu_custom_call.1} parent=1 // pred_check
      _
    $region67: #{tpu_custom_call.1} parent=1 // pred_check_branch
      %611 = sbr.rel (0) target = $region69
    $region68: #{tpu_custom_call.1} parent=1 // pred_region
      _
    $region69: #{tpu_custom_call.1} parent=1 // pred_fallthru
      _
    %612 = vsyncpa [#allocation4], 1
    %613 = vsyncpa [#allocation7], 1
    %614 = vsyncpa [#allocation5], 1

</llo_original>
